<compile_context>
chip_gen: v5e
topology: v5e:2x2
jax: 0.10.0
libtpu: 0.0.40
codegen_flags: <defaults>
</compile_context>

<pallas_src>
import functools

import jax
import jax.numpy as jnp
from jax.experimental import pallas as pl
from jax.experimental.pallas import tpu as pltpu


# ----------------------------------------------------------------------------
# Kernel
# ----------------------------------------------------------------------------
def _swish(v, beta, gates_bf16):
    """x * sigmoid(beta*x) as exp + approx reciprocal (both on the EUP slot).

    gates_bf16=True evaluates the exp in bf16 (v6e/v7x EUP bf16 path, ~2x
    transcendental throughput); False keeps everything f32 (correct choice on
    v5e, which has no bf16 VPU/EUP)."""
    arg = beta * v
    if gates_bf16:
        e = jnp.exp((-arg).astype(jnp.bfloat16)).astype(jnp.float32)
    else:
        e = jnp.exp(-arg)
    return v * pl.reciprocal(1.0 + e, approx=True)


def score_kernel(x_ref,                        # [dim, TB]  batch tile (lane-dense)
                 xw_ref, xb_ref,               # x_linear   (dh, dim), (dh, 1)
                 ln_w_ref, ln_b_ref, sw1_ref,  # per-block  (nb, dh, 1)
                 w1_ref, b1_ref,               # (nb, 2dh, dh), (nb, 2dh, 1) [time path folded into b1]
                 sw2_ref,                      # (nb, 2dh, 1)
                 w2_ref, b2_ref, sw3_ref,      # (nb, dh, 2dh), (nb, dh, 1), (nb, dh, 1)
                 fw_ref, fb_ref,               # final      (dh, 1), (1, 1)
                 out_ref,                      # [1, TB]
                 *, gates_bf16):
    x = x_ref[...]                                                    # [dim, TB]

    # x_linear : dim -> dh                                              [dh, TB]
    h = jnp.dot(xw_ref[...], x, preferred_element_type=jnp.float32) + xb_ref[...]

    nb = ln_w_ref.shape[0]          # = k - 1 residual blocks actually used
    inv_dh = 1.0 / float(h.shape[0])

    for i in range(nb):             # static unroll over residual blocks
        ln_w = ln_w_ref[i]; ln_b = ln_b_ref[i]
        sw1 = sw1_ref[i];   w1 = w1_ref[i];   b1 = b1_ref[i]
        sw2 = sw2_ref[i];   w2 = w2_ref[i];   b2 = b2_ref[i]
        sw3 = sw3_ref[i]

        # --- net1: LayerNorm(dh) (two-pass, matches torch) -> Swish -> Linear
        mu = jnp.sum(h, axis=0, keepdims=True) * inv_dh               # [1, TB]
        d = h - mu
        var = jnp.sum(d * d, axis=0, keepdims=True) * inv_dh
        hn = d * jax.lax.rsqrt(var + 1e-5)
        hn = hn * ln_w + ln_b
        hn = _swish(hn, sw1, gates_bf16)                              # Swish(dh)

        # Linear(dh, 2dh); the (batch-constant) time path is folded into b1
        z = jnp.dot(w1, hn, preferred_element_type=jnp.float32) + b1  # [2dh, TB]

        # --- net2: Swish(2dh) -> Linear(2dh, dh) -> Swish(dh), + residual ----
        z = _swish(z, sw2, gates_bf16)                                # Swish(2dh)
        w = jnp.dot(w2, z, preferred_element_type=jnp.float32) + b2   # [dh, TB]
        w = _swish(w, sw3, gates_bf16)                                # Swish(dh)
        h = w + h

    # final Linear(dh, 1) as VPU multiply + sublane reduce (no N=1 matmul);
    # the output is a lane-dense [1, TB] slab.
    out = jnp.sum(h * fw_ref[...], axis=0, keepdims=True) + fb_ref[...]
    out_ref[...] = out.astype(out_ref.dtype)


# ----------------------------------------------------------------------------
# Wrapper
# ----------------------------------------------------------------------------
def _round_up(n, m):
    return ((n + m - 1) // m) * m


def _resident_spec(arr):
    """Full-array BlockSpec with a constant index_map -> stays VMEM-resident."""
    zeros = (0,) * arr.ndim
    return pl.BlockSpec(arr.shape, lambda i, z=zeros: z)


_GATES_BF16_CACHE = None


def _default_bf16_gates():
    """bf16 swish gates on v6e/v7x (bf16 EUP), f32 on v5e and unknown chips."""
    global _GATES_BF16_CACHE
    if _GATES_BF16_CACHE is None:
        try:
            kind = jax.devices()[0].device_kind.lower()
        except Exception:
            kind = ""
        _GATES_BF16_CACHE = ("v6" in kind) or ("v7" in kind) or ("7x" in kind)
    return _GATES_BF16_CACHE


@functools.partial(jax.jit, static_argnames=("use_bf16_gates",))
def _score_forward_jit(x, t, params, *, use_bf16_gates):
    B, dim = x.shape
    M = params["M"]

    # ---- time path (one row shared by the whole batch): fold into b1 -------
    # TODO(synk): assumes a single scalar t shared by the batch (the module's
    # interface); per-row t would need a [B, dt] path instead.
    idx = (t.reshape(-1) * M).astype(jnp.int32)[0]           # scalar index
    temb = params["emb"][idx].astype(jnp.float32)            # [dt]
    v = jnp.einsum("d,ndh->nh", temb, params["tw"]) + params["tb"]   # [nb, 2dh]
    b1_eff = (params["b1"] + v)[..., None]                   # [nb, 2dh, 1]

    # ---- batch tiling: large lane-dense tiles, >=2 grid steps when possible
    # (so dimension_semantics=("parallel",) can shard across v7x's 2 TCs) ----
    TB_MAX = 1024
    b128 = _round_up(B, 128)
    if b128 >= 256:
        TB = min(TB_MAX, (b128 // 2) // 128 * 128)
    else:
        TB = 128
    B_pad = _round_up(b128, TB)
    grid = (B_pad // TB,)

    # pad + transpose fuse into the jitted executable (tiny: B_pad*dim floats)
    xT = jnp.pad(x.astype(jnp.float32), ((0, B_pad - B), (0, 0))).T   # [dim, B_pad]

    weights = (params["xw"], params["xb"],
               params["ln_w"], params["ln_b"], params["sw1"],
               params["w1"], b1_eff,
               params["sw2"],
               params["w2"], params["b2"], params["sw3"],
               params["fw"], params["fb"])

    in_specs = [pl.BlockSpec((dim, TB), lambda i: (0, i))] + [
        _resident_spec(w) for w in weights
    ]

    out_padded = pl.pallas_call(
        functools.partial(score_kernel, gates_bf16=use_bf16_gates),
        out_shape=jax.ShapeDtypeStruct((1, B_pad), jnp.float32),
        grid=grid,
        in_specs=in_specs,
        out_specs=pl.BlockSpec((1, TB), lambda i: (0, i)),
        compiler_params=pltpu.CompilerParams(
            dimension_semantics=("parallel",),
            vmem_limit_bytes=32 * 1024 * 1024,
        ),
    )(xT, *weights)

    return out_padded[0, :B].reshape(B, 1)


def score_forward(x, t, params, use_bf16_gates=None):
    """Pallas-backed equivalent of Score.forward(x, t).

    x : [B, dim] float32,  t : 1-element array in [0, 1].
    use_bf16_gates : None = auto (bf16 swish gates on v6e/v7x, f32 on v5e).
    """
    if use_bf16_gates is None:
        use_bf16_gates = _default_bf16_gates()
    return _score_forward_jit(x, t, params, use_bf16_gates=bool(use_bf16_gates))


# ----------------------------------------------------------------------------
# Deterministic parameter init (mirrors the __init__ shapes of Score).
# Linear weights are stored (out_features, in_features) so the kernel can
# compute W @ h directly in the transposed (batch-as-lane) layout.
# ----------------------------------------------------------------------------
def init_params(key, dim, M, dh, dt, k):
    nb = k - 1  # only the first k-1 residual blocks are used in forward
    keys = jax.random.split(key, 5)

    def uni(kk, shape, fan_in):
        bound = 1.0 / (fan_in ** 0.5)
        return jax.random.uniform(kk, shape, jnp.float32, -bound, bound)

    k_emb, k_x, k_1, k_t, k_2 = keys
    kx_w, kx_b = jax.random.split(k_x)
    k1_w, k1_b = jax.random.split(k_1)
    kt_w, kt_b = jax.random.split(k_t)
    k2_w, k2_b = jax.random.split(k_2)

    params = dict(
        M=M,
        emb=jax.random.normal(k_emb, (M + 1, dt), jnp.float32),
        xw=uni(kx_w, (dh, dim), dim), xb=uni(kx_b, (dh, 1), dim),
        ln_w=jnp.ones((nb, dh, 1), jnp.float32),
        ln_b=jnp.zeros((nb, dh, 1), jnp.float32),
        sw1=jnp.ones((nb, dh, 1), jnp.float32),          # Swish beta init = 1
        w1=uni(k1_w, (nb, 2 * dh, dh), dh), b1=uni(k1_b, (nb, 2 * dh), dh),
        tw=uni(kt_w, (nb, dt, 2 * dh), dt), tb=uni(kt_b, (nb, 2 * dh), dt),
        sw2=jnp.ones((nb, 2 * dh, 1), jnp.float32),
        w2=uni(k2_w, (nb, dh, 2 * dh), 2 * dh), b2=uni(k2_b, (nb, dh, 1), 2 * dh),
        sw3=jnp.ones((nb, dh, 1), jnp.float32),
        fw=jnp.zeros((dh, 1), jnp.float32),              # torch.nn.init.zeros_
        fb=jnp.zeros((1, 1), jnp.float32),
    )
    return params


# ----------------------------------------------------------------------------
# Pure-JAX reference (PyTorch semantics, row-major) for correctness checks
# ----------------------------------------------------------------------------
def score_forward_ref(x, t, params):
    B = x.shape[0]
    idx = jnp.tile((t.reshape(-1) * params["M"]).astype(jnp.int32), B)
    temb = params["emb"][idx]                                    # [B, dt]
    h = x @ params["xw"].T + params["xb"][:, 0]                  # [B, dh]
    nb = params["ln_w"].shape[0]
    for i in range(nb):
        mu = jnp.mean(h, axis=-1, keepdims=True)
        var = jnp.mean((h - mu) ** 2, axis=-1, keepdims=True)
        hn = (h - mu) * jax.lax.rsqrt(var + 1e-5)
        hn = hn * params["ln_w"][i, :, 0] + params["ln_b"][i, :, 0]
        hn = hn * jax.nn.sigmoid(params["sw1"][i, :, 0] * hn)
        u = hn @ params["w1"][i].T + params["b1"][i]
        v = temb @ params["tw"][i] + params["tb"][i]
        z = u + v
        z = z * jax.nn.sigmoid(params["sw2"][i, :, 0] * z)
        w = z @ params["w2"][i].T + params["b2"][i, :, 0]
        w = w * jax.nn.sigmoid(params["sw3"][i, :, 0] * w)
        h = w + h
    return h @ params["fw"] + params["fb"][0]


# ----------------------------------------------------------------------------
if __name__ == "__main__":
    # Shapes consistent with the module: Score(dim=4, M=10, dh=32, dt=16, k=3)
    dim, M, dh, dt, k = 4, 10, 32, 16, 3

    key = jax.random.PRNGKey(0)
    k_param, k_x1, k_x2, k_fw, k_fb = jax.random.split(key, 5)
    params = init_params(k_param, dim, M, dh, dt, k)
    t = jnp.array([0.37], jnp.float32)

    # The module zero-inits the final layer (output would be exactly 0 and the
    # check vacuous), so use a non-zero final layer for all correctness tests.
    params_nz = dict(params)
    params_nz["fw"] = jax.random.uniform(k_fw, (dh, 1), jnp.float32, -0.5, 0.5)
    params_nz["fb"] = jax.random.uniform(k_fb, (1, 1), jnp.float32, -0.5, 0.5)

    # Case 1: small batch (B=8 -> TB=128, grid=(1,)), f32 gates, tight check.
    x1 = jax.random.normal(k_x1, (8, dim), jnp.float32)
    out1 = jax.block_until_ready(score_forward(x1, t, params_nz, use_bf16_gates=False))
    ref1 = score_forward_ref(x1, t, params_nz)
    assert out1.shape == (8, 1), out1.shape
    assert jnp.allclose(out1, ref1, atol=5e-3, rtol=5e-3), "mismatch vs reference (case 1)"

    # Case 2: B=1024 -> TB=512, grid=(2,) (exercises tiling + 2-step grid for
    # v7x 2-TC sharding), f32 gates, tight check.
    x2 = jax.random.normal(k_x2, (1024, dim), jnp.float32)
    out2 = jax.block_until_ready(score_forward(x2, t, params_nz, use_bf16_gates=False))
    ref2 = score_forward_ref(x2, t, params_nz)
    assert out2.shape == (1024, 1), out2.shape
    assert jnp.allclose(out2, ref2, atol=5e-3, rtol=5e-3), "mismatch vs reference (case 2)"

    # Case 3: auto gate precision (bf16 swish gates on v6e/v7x, f32 on v5e) —
    # looser tolerance because of the reduced-precision gates on v6e/v7x.
    out3 = jax.block_until_ready(score_forward(x2, t, params_nz))
    assert out3.shape == (1024, 1), out3.shape
    assert jnp.allclose(out3, ref2, atol=1e-1, rtol=1e-1), "mismatch vs reference (case 3)"

    print("KERNEL_OK")
</pallas_src>

<mosaic_0001>
module attributes {stable_mosaic.version = 11 : i64} {
  func.func @score_kernel(%arg0: i32, %arg1: memref<4x128xf32, #tpu.memory_space<vmem>>, %arg2: memref<32x4xf32, #tpu.memory_space<vmem>>, %arg3: memref<32x1xf32, #tpu.memory_space<vmem>>, %arg4: memref<2x32x1xf32, #tpu.memory_space<vmem>>, %arg5: memref<2x32x1xf32, #tpu.memory_space<vmem>>, %arg6: memref<2x32x1xf32, #tpu.memory_space<vmem>>, %arg7: memref<2x64x32xf32, #tpu.memory_space<vmem>>, %arg8: memref<2x64x1xf32, #tpu.memory_space<vmem>>, %arg9: memref<2x64x1xf32, #tpu.memory_space<vmem>>, %arg10: memref<2x32x64xf32, #tpu.memory_space<vmem>>, %arg11: memref<2x32x1xf32, #tpu.memory_space<vmem>>, %arg12: memref<2x32x1xf32, #tpu.memory_space<vmem>>, %arg13: memref<32x1xf32, #tpu.memory_space<vmem>>, %arg14: memref<1x1xf32, #tpu.memory_space<vmem>>, %arg15: memref<1x128xf32, #tpu.memory_space<vmem>>) attributes {dimension_semantics = [#tpu.dimension_semantics<parallel>], iteration_bounds = array<i64: 1>, scalar_prefetch = 0 : i64, scratch_operands = 0 : i64, tpu.core_type = #tpu.core_type<tc>, window_params = [{transform_indices = @transform_0, window_bounds = array<i64: 4, 128>}, {pipeline_mode = #tpu.pipeline_mode<synchronous>, transform_indices = @transform_1, window_bounds = array<i64: 32, 4>}, {pipeline_mode = #tpu.pipeline_mode<synchronous>, transform_indices = @transform_2, window_bounds = array<i64: 32, 1>}, {pipeline_mode = #tpu.pipeline_mode<synchronous>, transform_indices = @transform_3, window_bounds = array<i64: 2, 32, 1>}, {pipeline_mode = #tpu.pipeline_mode<synchronous>, transform_indices = @transform_4, window_bounds = array<i64: 2, 32, 1>}, {pipeline_mode = #tpu.pipeline_mode<synchronous>, transform_indices = @transform_5, window_bounds = array<i64: 2, 32, 1>}, {pipeline_mode = #tpu.pipeline_mode<synchronous>, transform_indices = @transform_6, window_bounds = array<i64: 2, 64, 32>}, {pipeline_mode = #tpu.pipeline_mode<synchronous>, transform_indices = @transform_7, window_bounds = array<i64: 2, 64, 1>}, {pipeline_mode = #tpu.pipeline_mode<synchronous>, transform_indices = @transform_8, window_bounds = array<i64: 2, 64, 1>}, {pipeline_mode = #tpu.pipeline_mode<synchronous>, transform_indices = @transform_9, window_bounds = array<i64: 2, 32, 64>}, {pipeline_mode = #tpu.pipeline_mode<synchronous>, transform_indices = @transform_10, window_bounds = array<i64: 2, 32, 1>}, {pipeline_mode = #tpu.pipeline_mode<synchronous>, transform_indices = @transform_11, window_bounds = array<i64: 2, 32, 1>}, {pipeline_mode = #tpu.pipeline_mode<synchronous>, transform_indices = @transform_12, window_bounds = array<i64: 32, 1>}, {pipeline_mode = #tpu.pipeline_mode<synchronous>, transform_indices = @transform_13, window_bounds = array<i64: 1, 1>}, {transform_indices = @transform_14, window_bounds = array<i64: 1, 128>}]} {
    %c0 = arith.constant 0 : index
    %c0_0 = arith.constant 0 : index
    %0 = vector.load %arg1[%c0, %c0_0] : memref<4x128xf32, #tpu.memory_space<vmem>>, vector<4x128xf32>
    %c0_1 = arith.constant 0 : index
    %c0_2 = arith.constant 0 : index
    %1 = vector.load %arg2[%c0_1, %c0_2] : memref<32x4xf32, #tpu.memory_space<vmem>>, vector<32x4xf32>
    %cst = arith.constant dense<0.000000e+00> : vector<32x128xf32>
    %2 = tpu.matmul %1, %0, %cst {dimension_numbers = #tpu.dot_dimension_numbers<[1], [0], [0], [1], [0, 0, 1, 1], [], []>} : vector<32x4xf32>, vector<4x128xf32>, vector<32x128xf32> -> vector<32x128xf32>
    %c0_3 = arith.constant 0 : index
    %c0_4 = arith.constant 0 : index
    %3 = vector.load %arg3[%c0_3, %c0_4] : memref<32x1xf32, #tpu.memory_space<vmem>>, vector<32x1xf32>
    %4 = vector.broadcast %3 : vector<32x1xf32> to vector<32x128xf32>
    %5 = arith.addf %2, %4 : vector<32x128xf32>
    %c0_5 = arith.constant 0 : index
    %c0_6 = arith.constant 0 : index
    %c0_7 = arith.constant 0 : index
    %6 = vector.load %arg4[%c0_5, %c0_6, %c0_7] : memref<2x32x1xf32, #tpu.memory_space<vmem>>, vector<1x32x1xf32>
    %7 = vector.shape_cast %6 : vector<1x32x1xf32> to vector<32x1xf32>
    %c0_8 = arith.constant 0 : index
    %c0_9 = arith.constant 0 : index
    %c0_10 = arith.constant 0 : index
    %8 = vector.load %arg5[%c0_8, %c0_9, %c0_10] : memref<2x32x1xf32, #tpu.memory_space<vmem>>, vector<1x32x1xf32>
    %9 = vector.shape_cast %8 : vector<1x32x1xf32> to vector<32x1xf32>
    %c0_11 = arith.constant 0 : index
    %c0_12 = arith.constant 0 : index
    %c0_13 = arith.constant 0 : index
    %10 = vector.load %arg6[%c0_11, %c0_12, %c0_13] : memref<2x32x1xf32, #tpu.memory_space<vmem>>, vector<1x32x1xf32>
    %11 = vector.shape_cast %10 : vector<1x32x1xf32> to vector<32x1xf32>
    %c0_14 = arith.constant 0 : index
    %c0_15 = arith.constant 0 : index
    %c0_16 = arith.constant 0 : index
    %12 = vector.load %arg7[%c0_14, %c0_15, %c0_16] : memref<2x64x32xf32, #tpu.memory_space<vmem>>, vector<1x64x32xf32>
    %13 = vector.shape_cast %12 : vector<1x64x32xf32> to vector<64x32xf32>
    %c0_17 = arith.constant 0 : index
    %c0_18 = arith.constant 0 : index
    %c0_19 = arith.constant 0 : index
    %14 = vector.load %arg8[%c0_17, %c0_18, %c0_19] : memref<2x64x1xf32, #tpu.memory_space<vmem>>, vector<1x64x1xf32>
    %15 = vector.shape_cast %14 : vector<1x64x1xf32> to vector<64x1xf32>
    %c0_20 = arith.constant 0 : index
    %c0_21 = arith.constant 0 : index
    %c0_22 = arith.constant 0 : index
    %16 = vector.load %arg9[%c0_20, %c0_21, %c0_22] : memref<2x64x1xf32, #tpu.memory_space<vmem>>, vector<1x64x1xf32>
    %17 = vector.shape_cast %16 : vector<1x64x1xf32> to vector<64x1xf32>
    %c0_23 = arith.constant 0 : index
    %c0_24 = arith.constant 0 : index
    %c0_25 = arith.constant 0 : index
    %18 = vector.load %arg10[%c0_23, %c0_24, %c0_25] : memref<2x32x64xf32, #tpu.memory_space<vmem>>, vector<1x32x64xf32>
    %19 = vector.shape_cast %18 : vector<1x32x64xf32> to vector<32x64xf32>
    %c0_26 = arith.constant 0 : index
    %c0_27 = arith.constant 0 : index
    %c0_28 = arith.constant 0 : index
    %20 = vector.load %arg11[%c0_26, %c0_27, %c0_28] : memref<2x32x1xf32, #tpu.memory_space<vmem>>, vector<1x32x1xf32>
    %21 = vector.shape_cast %20 : vector<1x32x1xf32> to vector<32x1xf32>
    %c0_29 = arith.constant 0 : index
    %c0_30 = arith.constant 0 : index
    %c0_31 = arith.constant 0 : index
    %22 = vector.load %arg12[%c0_29, %c0_30, %c0_31] : memref<2x32x1xf32, #tpu.memory_space<vmem>>, vector<1x32x1xf32>
    %23 = vector.shape_cast %22 : vector<1x32x1xf32> to vector<32x1xf32>
    %cst_32 = arith.constant dense<0.000000e+00> : vector<128xf32>
    %24 = vector.multi_reduction <add>, %5, %cst_32 [0] : vector<32x128xf32> to vector<128xf32>
    %25 = vector.shape_cast %24 : vector<128xf32> to vector<1x128xf32>
    %cst_33 = arith.constant 3.125000e-02 : f32
    %26 = vector.broadcast %cst_33 : f32 to vector<1x128xf32>
    %27 = arith.mulf %25, %26 : vector<1x128xf32>
    %28 = vector.broadcast %27 : vector<1x128xf32> to vector<32x128xf32>
    %29 = arith.subf %5, %28 : vector<32x128xf32>
    %30 = arith.mulf %29, %29 : vector<32x128xf32>
    %cst_34 = arith.constant dense<0.000000e+00> : vector<128xf32>
    %31 = vector.multi_reduction <add>, %30, %cst_34 [0] : vector<32x128xf32> to vector<128xf32>
    %32 = vector.shape_cast %31 : vector<128xf32> to vector<1x128xf32>
    %cst_35 = arith.constant 3.125000e-02 : f32
    %33 = vector.broadcast %cst_35 : f32 to vector<1x128xf32>
    %34 = arith.mulf %32, %33 : vector<1x128xf32>
    %cst_36 = arith.constant 9.99999974E-6 : f32
    %35 = vector.broadcast %cst_36 : f32 to vector<1x128xf32>
    %36 = arith.addf %34, %35 : vector<1x128xf32>
    %37 = math.rsqrt %36 : vector<1x128xf32>
    %38 = vector.broadcast %37 : vector<1x128xf32> to vector<32x128xf32>
    %39 = arith.mulf %29, %38 : vector<32x128xf32>
    %40 = vector.broadcast %7 : vector<32x1xf32> to vector<32x128xf32>
    %41 = arith.mulf %39, %40 : vector<32x128xf32>
    %42 = vector.broadcast %9 : vector<32x1xf32> to vector<32x128xf32>
    %43 = arith.addf %41, %42 : vector<32x128xf32>
    %44 = vector.broadcast %11 : vector<32x1xf32> to vector<32x128xf32>
    %45 = arith.mulf %44, %43 : vector<32x128xf32>
    %cst_37 = arith.constant 0.000000e+00 : f32
    %46 = vector.broadcast %cst_37 : f32 to vector<32x128xf32>
    %47 = arith.subf %46, %45 : vector<32x128xf32>
    %48 = math.exp %47 : vector<32x128xf32>
    %cst_38 = arith.constant 1.000000e+00 : f32
    %49 = vector.broadcast %cst_38 : f32 to vector<32x128xf32>
    %50 = arith.addf %49, %48 : vector<32x128xf32>
    %51 = tpu.reciprocal %50 {approx = true} : vector<32x128xf32> -> vector<32x128xf32>
    %52 = arith.mulf %43, %51 : vector<32x128xf32>
    %cst_39 = arith.constant dense<0.000000e+00> : vector<64x128xf32>
    %53 = tpu.matmul %13, %52, %cst_39 {dimension_numbers = #tpu.dot_dimension_numbers<[1], [0], [0], [1], [0, 0, 1, 1], [], []>} : vector<64x32xf32>, vector<32x128xf32>, vector<64x128xf32> -> vector<64x128xf32>
    %54 = vector.broadcast %15 : vector<64x1xf32> to vector<64x128xf32>
    %55 = arith.addf %53, %54 : vector<64x128xf32>
    %56 = vector.broadcast %17 : vector<64x1xf32> to vector<64x128xf32>
    %57 = arith.mulf %56, %55 : vector<64x128xf32>
    %cst_40 = arith.constant 0.000000e+00 : f32
    %58 = vector.broadcast %cst_40 : f32 to vector<64x128xf32>
    %59 = arith.subf %58, %57 : vector<64x128xf32>
    %60 = math.exp %59 : vector<64x128xf32>
    %cst_41 = arith.constant 1.000000e+00 : f32
    %61 = vector.broadcast %cst_41 : f32 to vector<64x128xf32>
    %62 = arith.addf %61, %60 : vector<64x128xf32>
    %63 = tpu.reciprocal %62 {approx = true} : vector<64x128xf32> -> vector<64x128xf32>
    %64 = arith.mulf %55, %63 : vector<64x128xf32>
    %cst_42 = arith.constant dense<0.000000e+00> : vector<32x128xf32>
    %65 = tpu.matmul %19, %64, %cst_42 {dimension_numbers = #tpu.dot_dimension_numbers<[1], [0], [0], [1], [0, 0, 1, 1], [], []>} : vector<32x64xf32>, vector<64x128xf32>, vector<32x128xf32> -> vector<32x128xf32>
    %66 = vector.broadcast %21 : vector<32x1xf32> to vector<32x128xf32>
    %67 = arith.addf %65, %66 : vector<32x128xf32>
    %68 = vector.broadcast %23 : vector<32x1xf32> to vector<32x128xf32>
    %69 = arith.mulf %68, %67 : vector<32x128xf32>
    %cst_43 = arith.constant 0.000000e+00 : f32
    %70 = vector.broadcast %cst_43 : f32 to vector<32x128xf32>
    %71 = arith.subf %70, %69 : vector<32x128xf32>
    %72 = math.exp %71 : vector<32x128xf32>
    %cst_44 = arith.constant 1.000000e+00 : f32
    %73 = vector.broadcast %cst_44 : f32 to vector<32x128xf32>
    %74 = arith.addf %73, %72 : vector<32x128xf32>
    %75 = tpu.reciprocal %74 {approx = true} : vector<32x128xf32> -> vector<32x128xf32>
    %76 = arith.mulf %67, %75 : vector<32x128xf32>
    %77 = arith.addf %76, %5 : vector<32x128xf32>
    %c1 = arith.constant 1 : index
    %c0_45 = arith.constant 0 : index
    %c0_46 = arith.constant 0 : index
    %78 = vector.load %arg4[%c1, %c0_45, %c0_46] : memref<2x32x1xf32, #tpu.memory_space<vmem>>, vector<1x32x1xf32>
    %79 = vector.shape_cast %78 : vector<1x32x1xf32> to vector<32x1xf32>
    %c1_47 = arith.constant 1 : index
    %c0_48 = arith.constant 0 : index
    %c0_49 = arith.constant 0 : index
    %80 = vector.load %arg5[%c1_47, %c0_48, %c0_49] : memref<2x32x1xf32, #tpu.memory_space<vmem>>, vector<1x32x1xf32>
    %81 = vector.shape_cast %80 : vector<1x32x1xf32> to vector<32x1xf32>
    %c1_50 = arith.constant 1 : index
    %c0_51 = arith.constant 0 : index
    %c0_52 = arith.constant 0 : index
    %82 = vector.load %arg6[%c1_50, %c0_51, %c0_52] : memref<2x32x1xf32, #tpu.memory_space<vmem>>, vector<1x32x1xf32>
    %83 = vector.shape_cast %82 : vector<1x32x1xf32> to vector<32x1xf32>
    %c1_53 = arith.constant 1 : index
    %c0_54 = arith.constant 0 : index
    %c0_55 = arith.constant 0 : index
    %84 = vector.load %arg7[%c1_53, %c0_54, %c0_55] : memref<2x64x32xf32, #tpu.memory_space<vmem>>, vector<1x64x32xf32>
    %85 = vector.shape_cast %84 : vector<1x64x32xf32> to vector<64x32xf32>
    %c1_56 = arith.constant 1 : index
    %c0_57 = arith.constant 0 : index
    %c0_58 = arith.constant 0 : index
    %86 = vector.load %arg8[%c1_56, %c0_57, %c0_58] : memref<2x64x1xf32, #tpu.memory_space<vmem>>, vector<1x64x1xf32>
    %87 = vector.shape_cast %86 : vector<1x64x1xf32> to vector<64x1xf32>
    %c1_59 = arith.constant 1 : index
    %c0_60 = arith.constant 0 : index
    %c0_61 = arith.constant 0 : index
    %88 = vector.load %arg9[%c1_59, %c0_60, %c0_61] : memref<2x64x1xf32, #tpu.memory_space<vmem>>, vector<1x64x1xf32>
    %89 = vector.shape_cast %88 : vector<1x64x1xf32> to vector<64x1xf32>
    %c1_62 = arith.constant 1 : index
    %c0_63 = arith.constant 0 : index
    %c0_64 = arith.constant 0 : index
    %90 = vector.load %arg10[%c1_62, %c0_63, %c0_64] : memref<2x32x64xf32, #tpu.memory_space<vmem>>, vector<1x32x64xf32>
    %91 = vector.shape_cast %90 : vector<1x32x64xf32> to vector<32x64xf32>
    %c1_65 = arith.constant 1 : index
    %c0_66 = arith.constant 0 : index
    %c0_67 = arith.constant 0 : index
    %92 = vector.load %arg11[%c1_65, %c0_66, %c0_67] : memref<2x32x1xf32, #tpu.memory_space<vmem>>, vector<1x32x1xf32>
    %93 = vector.shape_cast %92 : vector<1x32x1xf32> to vector<32x1xf32>
    %c1_68 = arith.constant 1 : index
    %c0_69 = arith.constant 0 : index
    %c0_70 = arith.constant 0 : index
    %94 = vector.load %arg12[%c1_68, %c0_69, %c0_70] : memref<2x32x1xf32, #tpu.memory_space<vmem>>, vector<1x32x1xf32>
    %95 = vector.shape_cast %94 : vector<1x32x1xf32> to vector<32x1xf32>
    %cst_71 = arith.constant dense<0.000000e+00> : vector<128xf32>
    %96 = vector.multi_reduction <add>, %77, %cst_71 [0] : vector<32x128xf32> to vector<128xf32>
    %97 = vector.shape_cast %96 : vector<128xf32> to vector<1x128xf32>
    %cst_72 = arith.constant 3.125000e-02 : f32
    %98 = vector.broadcast %cst_72 : f32 to vector<1x128xf32>
    %99 = arith.mulf %97, %98 : vector<1x128xf32>
    %100 = vector.broadcast %99 : vector<1x128xf32> to vector<32x128xf32>
    %101 = arith.subf %77, %100 : vector<32x128xf32>
    %102 = arith.mulf %101, %101 : vector<32x128xf32>
    %cst_73 = arith.constant dense<0.000000e+00> : vector<128xf32>
    %103 = vector.multi_reduction <add>, %102, %cst_73 [0] : vector<32x128xf32> to vector<128xf32>
    %104 = vector.shape_cast %103 : vector<128xf32> to vector<1x128xf32>
    %cst_74 = arith.constant 3.125000e-02 : f32
    %105 = vector.broadcast %cst_74 : f32 to vector<1x128xf32>
    %106 = arith.mulf %104, %105 : vector<1x128xf32>
    %cst_75 = arith.constant 9.99999974E-6 : f32
    %107 = vector.broadcast %cst_75 : f32 to vector<1x128xf32>
    %108 = arith.addf %106, %107 : vector<1x128xf32>
    %109 = math.rsqrt %108 : vector<1x128xf32>
    %110 = vector.broadcast %109 : vector<1x128xf32> to vector<32x128xf32>
    %111 = arith.mulf %101, %110 : vector<32x128xf32>
    %112 = vector.broadcast %79 : vector<32x1xf32> to vector<32x128xf32>
    %113 = arith.mulf %111, %112 : vector<32x128xf32>
    %114 = vector.broadcast %81 : vector<32x1xf32> to vector<32x128xf32>
    %115 = arith.addf %113, %114 : vector<32x128xf32>
    %116 = vector.broadcast %83 : vector<32x1xf32> to vector<32x128xf32>
    %117 = arith.mulf %116, %115 : vector<32x128xf32>
    %cst_76 = arith.constant 0.000000e+00 : f32
    %118 = vector.broadcast %cst_76 : f32 to vector<32x128xf32>
    %119 = arith.subf %118, %117 : vector<32x128xf32>
    %120 = math.exp %119 : vector<32x128xf32>
    %cst_77 = arith.constant 1.000000e+00 : f32
    %121 = vector.broadcast %cst_77 : f32 to vector<32x128xf32>
    %122 = arith.addf %121, %120 : vector<32x128xf32>
    %123 = tpu.reciprocal %122 {approx = true} : vector<32x128xf32> -> vector<32x128xf32>
    %124 = arith.mulf %115, %123 : vector<32x128xf32>
    %cst_78 = arith.constant dense<0.000000e+00> : vector<64x128xf32>
    %125 = tpu.matmul %85, %124, %cst_78 {dimension_numbers = #tpu.dot_dimension_numbers<[1], [0], [0], [1], [0, 0, 1, 1], [], []>} : vector<64x32xf32>, vector<32x128xf32>, vector<64x128xf32> -> vector<64x128xf32>
    %126 = vector.broadcast %87 : vector<64x1xf32> to vector<64x128xf32>
    %127 = arith.addf %125, %126 : vector<64x128xf32>
    %128 = vector.broadcast %89 : vector<64x1xf32> to vector<64x128xf32>
    %129 = arith.mulf %128, %127 : vector<64x128xf32>
    %cst_79 = arith.constant 0.000000e+00 : f32
    %130 = vector.broadcast %cst_79 : f32 to vector<64x128xf32>
    %131 = arith.subf %130, %129 : vector<64x128xf32>
    %132 = math.exp %131 : vector<64x128xf32>
    %cst_80 = arith.constant 1.000000e+00 : f32
    %133 = vector.broadcast %cst_80 : f32 to vector<64x128xf32>
    %134 = arith.addf %133, %132 : vector<64x128xf32>
    %135 = tpu.reciprocal %134 {approx = true} : vector<64x128xf32> -> vector<64x128xf32>
    %136 = arith.mulf %127, %135 : vector<64x128xf32>
    %cst_81 = arith.constant dense<0.000000e+00> : vector<32x128xf32>
    %137 = tpu.matmul %91, %136, %cst_81 {dimension_numbers = #tpu.dot_dimension_numbers<[1], [0], [0], [1], [0, 0, 1, 1], [], []>} : vector<32x64xf32>, vector<64x128xf32>, vector<32x128xf32> -> vector<32x128xf32>
    %138 = vector.broadcast %93 : vector<32x1xf32> to vector<32x128xf32>
    %139 = arith.addf %137, %138 : vector<32x128xf32>
    %140 = vector.broadcast %95 : vector<32x1xf32> to vector<32x128xf32>
    %141 = arith.mulf %140, %139 : vector<32x128xf32>
    %cst_82 = arith.constant 0.000000e+00 : f32
    %142 = vector.broadcast %cst_82 : f32 to vector<32x128xf32>
    %143 = arith.subf %142, %141 : vector<32x128xf32>
    %144 = math.exp %143 : vector<32x128xf32>
    %cst_83 = arith.constant 1.000000e+00 : f32
    %145 = vector.broadcast %cst_83 : f32 to vector<32x128xf32>
    %146 = arith.addf %145, %144 : vector<32x128xf32>
    %147 = tpu.reciprocal %146 {approx = true} : vector<32x128xf32> -> vector<32x128xf32>
    %148 = arith.mulf %139, %147 : vector<32x128xf32>
    %149 = arith.addf %148, %77 : vector<32x128xf32>
    %c0_84 = arith.constant 0 : index
    %c0_85 = arith.constant 0 : index
    %150 = vector.load %arg13[%c0_84, %c0_85] : memref<32x1xf32, #tpu.memory_space<vmem>>, vector<32x1xf32>
    %151 = vector.broadcast %150 : vector<32x1xf32> to vector<32x128xf32>
    %152 = arith.mulf %149, %151 : vector<32x128xf32>
    %cst_86 = arith.constant dense<0.000000e+00> : vector<128xf32>
    %153 = vector.multi_reduction <add>, %152, %cst_86 [0] : vector<32x128xf32> to vector<128xf32>
    %154 = vector.shape_cast %153 : vector<128xf32> to vector<1x128xf32>
    %c0_87 = arith.constant 0 : index
    %c0_88 = arith.constant 0 : index
    %155 = vector.load %arg14[%c0_87, %c0_88] : memref<1x1xf32, #tpu.memory_space<vmem>>, vector<1x1xf32>
    %156 = vector.broadcast %155 : vector<1x1xf32> to vector<1x128xf32>
    %157 = arith.addf %154, %156 : vector<1x128xf32>
    %c0_89 = arith.constant 0 : index
    %c0_90 = arith.constant 0 : index
    %158 = vector.load %arg15[%c0_89, %c0_90] : memref<1x128xf32, #tpu.memory_space<vmem>>, vector<1x128xf32>
    tpu.vector_store %arg15[%c0_89, %c0_90], %157 {strides = array<i32>} : memref<1x128xf32, #tpu.memory_space<vmem>>, vector<1x128xf32>,
    return
  }
  func.func @transform_0(%arg0: i32) -> (i32, i32) {
    %c0_i32 = arith.constant 0 : i32
    %c0_i32_0 = arith.constant 0 : i32
    return %c0_i32, %arg0 : i32, i32
  }
  func.func @transform_1(%arg0: i32) -> (i32, i32) {
    %c0_i32 = arith.constant 0 : i32
    %c0_i32_0 = arith.constant 0 : i32
    %c0_i32_1 = arith.constant 0 : i32
    return %c0_i32, %c0_i32_0 : i32, i32
  }
  func.func @transform_2(%arg0: i32) -> (i32, i32) {
    %c0_i32 = arith.constant 0 : i32
    %c0_i32_0 = arith.constant 0 : i32
    %c0_i32_1 = arith.constant 0 : i32
    return %c0_i32, %c0_i32_0 : i32, i32
  }
  func.func @transform_3(%arg0: i32) -> (i32, i32, i32) {
    %c0_i32 = arith.constant 0 : i32
    %c0_i32_0 = arith.constant 0 : i32
    %c0_i32_1 = arith.constant 0 : i32
    %c0_i32_2 = arith.constant 0 : i32
    return %c0_i32, %c0_i32_0, %c0_i32_1 : i32, i32, i32
  }
  func.func @transform_4(%arg0: i32) -> (i32, i32, i32) {
    %c0_i32 = arith.constant 0 : i32
    %c0_i32_0 = arith.constant 0 : i32
    %c0_i32_1 = arith.constant 0 : i32
    %c0_i32_2 = arith.constant 0 : i32
    return %c0_i32, %c0_i32_0, %c0_i32_1 : i32, i32, i32
  }
  func.func @transform_5(%arg0: i32) -> (i32, i32, i32) {
    %c0_i32 = arith.constant 0 : i32
    %c0_i32_0 = arith.constant 0 : i32
    %c0_i32_1 = arith.constant 0 : i32
    %c0_i32_2 = arith.constant 0 : i32
    return %c0_i32, %c0_i32_0, %c0_i32_1 : i32, i32, i32
  }
  func.func @transform_6(%arg0: i32) -> (i32, i32, i32) {
    %c0_i32 = arith.constant 0 : i32
    %c0_i32_0 = arith.constant 0 : i32
    %c0_i32_1 = arith.constant 0 : i32
    %c0_i32_2 = arith.constant 0 : i32
    return %c0_i32, %c0_i32_0, %c0_i32_1 : i32, i32, i32
  }
  func.func @transform_7(%arg0: i32) -> (i32, i32, i32) {
    %c0_i32 = arith.constant 0 : i32
    %c0_i32_0 = arith.constant 0 : i32
    %c0_i32_1 = arith.constant 0 : i32
    %c0_i32_2 = arith.constant 0 : i32
    return %c0_i32, %c0_i32_0, %c0_i32_1 : i32, i32, i32
  }
  func.func @transform_8(%arg0: i32) -> (i32, i32, i32) {
    %c0_i32 = arith.constant 0 : i32
    %c0_i32_0 = arith.constant 0 : i32
    %c0_i32_1 = arith.constant 0 : i32
    %c0_i32_2 = arith.constant 0 : i32
    return %c0_i32, %c0_i32_0, %c0_i32_1 : i32, i32, i32
  }
  func.func @transform_9(%arg0: i32) -> (i32, i32, i32) {
    %c0_i32 = arith.constant 0 : i32
    %c0_i32_0 = arith.constant 0 : i32
    %c0_i32_1 = arith.constant 0 : i32
    %c0_i32_2 = arith.constant 0 : i32
    return %c0_i32, %c0_i32_0, %c0_i32_1 : i32, i32, i32
  }
  func.func @transform_10(%arg0: i32) -> (i32, i32, i32) {
    %c0_i32 = arith.constant 0 : i32
    %c0_i32_0 = arith.constant 0 : i32
    %c0_i32_1 = arith.constant 0 : i32
    %c0_i32_2 = arith.constant 0 : i32
    return %c0_i32, %c0_i32_0, %c0_i32_1 : i32, i32, i32
  }
  func.func @transform_11(%arg0: i32) -> (i32, i32, i32) {
    %c0_i32 = arith.constant 0 : i32
    %c0_i32_0 = arith.constant 0 : i32
    %c0_i32_1 = arith.constant 0 : i32
    %c0_i32_2 = arith.constant 0 : i32
    return %c0_i32, %c0_i32_0, %c0_i32_1 : i32, i32, i32
  }
  func.func @transform_12(%arg0: i32) -> (i32, i32) {
    %c0_i32 = arith.constant 0 : i32
    %c0_i32_0 = arith.constant 0 : i32
    %c0_i32_1 = arith.constant 0 : i32
    return %c0_i32, %c0_i32_0 : i32, i32
  }
  func.func @transform_13(%arg0: i32) -> (i32, i32) {
    %c0_i32 = arith.constant 0 : i32
    %c0_i32_0 = arith.constant 0 : i32
    %c0_i32_1 = arith.constant 0 : i32
    return %c0_i32, %c0_i32_0 : i32, i32
  }
  func.func @transform_14(%arg0: i32) -> (i32, i32) {
    %c0_i32 = arith.constant 0 : i32
    %c0_i32_0 = arith.constant 0 : i32
    return %c0_i32, %arg0 : i32, i32
  }
}

</mosaic_0001>

<llo_original>
// kernel: _score_forward_jit.1
$region0: #{_score_forward_jit.1}
  #allocation0 [shape = 'u32[]', space=smem, size = 0x4, offset = 0x4, fixed_abs, tag = 'smem constant byte address 0x4 - core index']
  #allocation1 [shape = 'u32[72,128]{1,0:T(1,128)}', space=vmem, size = 0x9000, scoped, tag = 'internal scratch']
  #allocation2 [shape = 'f32[1,1]{1,0:T(1,128)S(1)}', space=vmem, size = 0x200, scoped, tag = 'scoped memory for _score_forward_jit.1']
  %s0 = inlined_call_operand.vmem [shape: f32[4,128], index: 0, kind: input, shape index: {}]
  %s1 = inlined_call_operand.vmem [shape: f32[32,4], index: 1, kind: input, shape index: {}]
  %s2 = inlined_call_operand.vmem [shape: f32[32,1], index: 2, kind: input, shape index: {}]
  %s3 = inlined_call_operand.vmem [shape: f32[2,32,1], index: 3, kind: input, shape index: {}]
  %s4 = inlined_call_operand.vmem [shape: f32[2,32,1], index: 4, kind: input, shape index: {}]
  %s5 = inlined_call_operand.vmem [shape: f32[2,32,1], index: 5, kind: input, shape index: {}]
  %s6 = inlined_call_operand.vmem [shape: f32[2,64,32], index: 6, kind: input, shape index: {}]
  %s7 = inlined_call_operand.vmem [shape: f32[2,64,1], index: 7, kind: input, shape index: {}]
  %s8 = inlined_call_operand.vmem [shape: f32[2,64,1], index: 8, kind: input, shape index: {}]
  %s9 = inlined_call_operand.vmem [shape: f32[2,32,64], index: 9, kind: input, shape index: {}]
  %s10 = inlined_call_operand.vmem [shape: f32[2,32,1], index: 10, kind: input, shape index: {}]
  %s11 = inlined_call_operand.vmem [shape: f32[2,32,1], index: 11, kind: input, shape index: {}]
  %s12 = inlined_call_operand.vmem [shape: f32[32,1], index: 12, kind: input, shape index: {}]
  %s13 = inlined_call_operand.<no memory space> [shape: f32[1,1], index: 13, kind: input, shape index: {}]
  %s14 = inlined_call_operand.vmem [shape: f32[1,128], index: 14, kind: output, shape index: {}]
  %s15 = sld [smem:[#allocation0]]
  $region66: #{_score_forward_jit.1} parent=0
    _
  %s17 = ssub.s32 1, %s15
  %s18 = scalar_select 0, %s17, %s15
  %v19 = vstv %s13
  %20 = vst [vmem:[#allocation2] sm:$0x1] %v19
  // Predicated region
  $region2: #{_score_forward_jit.1} parent=0 // pred_check
    _
  $region3: #{_score_forward_jit.1} parent=0 // pred_check_branch
    %22 = sbr.rel (0) target = $region5
  $region4: #{_score_forward_jit.1} parent=0 // pred_region
    _
  $region5: #{_score_forward_jit.1} parent=0 // pred_fallthru
    _
  // Predicated region
  $region6: #{_score_forward_jit.1} parent=0 // pred_check
    _
  $region7: #{_score_forward_jit.1} parent=0 // pred_check_branch
    %24 = sbr.rel (0) target = $region9
  $region8: #{_score_forward_jit.1} parent=0 // pred_region
    _
  $region9: #{_score_forward_jit.1} parent=0 // pred_fallthru
    _
  // Predicated region
  $region10: #{_score_forward_jit.1} parent=0 // pred_check
    _
  $region11: #{_score_forward_jit.1} parent=0 // pred_check_branch
    %26 = sbr.rel (0) target = $region13
  $region12: #{_score_forward_jit.1} parent=0 // pred_region
    _
  $region13: #{_score_forward_jit.1} parent=0 // pred_fallthru
    _
  // Predicated region
  $region14: #{_score_forward_jit.1} parent=0 // pred_check
    _
  $region15: #{_score_forward_jit.1} parent=0 // pred_check_branch
    %28 = sbr.rel (0) target = $region17
  $region16: #{_score_forward_jit.1} parent=0 // pred_region
    _
  $region17: #{_score_forward_jit.1} parent=0 // pred_fallthru
    _
  // Predicated region
  $region18: #{_score_forward_jit.1} parent=0 // pred_check
    _
  $region19: #{_score_forward_jit.1} parent=0 // pred_check_branch
    %30 = sbr.rel (0) target = $region21
  $region20: #{_score_forward_jit.1} parent=0 // pred_region
    _
  $region21: #{_score_forward_jit.1} parent=0 // pred_fallthru
    _
  // Predicated region
  $region22: #{_score_forward_jit.1} parent=0 // pred_check
    _
  $region23: #{_score_forward_jit.1} parent=0 // pred_check_branch
    %32 = sbr.rel (0) target = $region25
  $region24: #{_score_forward_jit.1} parent=0 // pred_region
    _
  $region25: #{_score_forward_jit.1} parent=0 // pred_fallthru
    _
  // Predicated region
  $region26: #{_score_forward_jit.1} parent=0 // pred_check
    _
  $region27: #{_score_forward_jit.1} parent=0 // pred_check_branch
    %34 = sbr.rel (0) target = $region29
  $region28: #{_score_forward_jit.1} parent=0 // pred_region
    _
  $region29: #{_score_forward_jit.1} parent=0 // pred_fallthru
    _
  // Predicated region
  $region30: #{_score_forward_jit.1} parent=0 // pred_check
    _
  $region31: #{_score_forward_jit.1} parent=0 // pred_check_branch
    %36 = sbr.rel (0) target = $region33
  $region32: #{_score_forward_jit.1} parent=0 // pred_region
    _
  $region33: #{_score_forward_jit.1} parent=0 // pred_fallthru
    _
  // Predicated region
  $region34: #{_score_forward_jit.1} parent=0 // pred_check
    _
  $region35: #{_score_forward_jit.1} parent=0 // pred_check_branch
    %38 = sbr.rel (0) target = $region37
  $region36: #{_score_forward_jit.1} parent=0 // pred_region
    _
  $region37: #{_score_forward_jit.1} parent=0 // pred_fallthru
    _
  // Predicated region
  $region38: #{_score_forward_jit.1} parent=0 // pred_check
    _
  $region39: #{_score_forward_jit.1} parent=0 // pred_check_branch
    %40 = sbr.rel (0) target = $region41
  $region40: #{_score_forward_jit.1} parent=0 // pred_region
    _
  $region41: #{_score_forward_jit.1} parent=0 // pred_fallthru
    _
  // Predicated region
  $region42: #{_score_forward_jit.1} parent=0 // pred_check
    _
  $region43: #{_score_forward_jit.1} parent=0 // pred_check_branch
    %42 = sbr.rel (0) target = $region45
  $region44: #{_score_forward_jit.1} parent=0 // pred_region
    _
  $region45: #{_score_forward_jit.1} parent=0 // pred_fallthru
    _
  // Predicated region
  $region46: #{_score_forward_jit.1} parent=0 // pred_check
    _
  $region47: #{_score_forward_jit.1} parent=0 // pred_check_branch
    %44 = sbr.rel (0) target = $region49
  $region48: #{_score_forward_jit.1} parent=0 // pred_region
    _
  $region49: #{_score_forward_jit.1} parent=0 // pred_fallthru
    _
  // Predicated region
  $region50: #{_score_forward_jit.1} parent=0 // pred_check
    _
  $region51: #{_score_forward_jit.1} parent=0 // pred_check_branch
    %46 = sbr.rel (0) target = $region53
  $region52: #{_score_forward_jit.1} parent=0 // pred_region
    _
  $region53: #{_score_forward_jit.1} parent=0 // pred_fallthru
    _
  // Predicated region
  $region54: #{_score_forward_jit.1} parent=0 // pred_check
    _
  $region55: #{_score_forward_jit.1} parent=0 // pred_check_branch
    %48 = sbr.rel (0) target = $region57
  $region56: #{_score_forward_jit.1} parent=0 // pred_region
    _
  $region57: #{_score_forward_jit.1} parent=0 // pred_fallthru
    _
  %v49 = vld [vmem:[%s0] sm:$0xf]
  %v50 = vld [vmem:[%s1] sm:$0xff]
  %v51 = vld [vmem:[%s1 + $0x8] sm:$0xff]
  %v52 = vld [vmem:[%s1 + $0x10] sm:$0xff]
  %v53 = vld [vmem:[%s1 + $0x18] sm:$0xff]
  %v54 = vld [vmem:[%s2] sm:$0xff]
  %v55 = vld [vmem:[%s2 + $0x8] sm:$0xff]
  %v56 = vld [vmem:[%s2 + $0x10] sm:$0xff]
  %v57 = vld [vmem:[%s2 + $0x18] sm:$0xff]
  %59 = vset.pattern.permute.xlu0 0
  %60 = vperm.xlu0 %59, %v54
  %v61 = vpop.permute.xlu0 %60
  %64 = vset.pattern.permute.xlu0 0
  %65 = vperm.xlu0 %64, %v55
  %v66 = vpop.permute.xlu0 %65
  %69 = vset.pattern.permute.xlu0 0
  %70 = vperm.xlu0 %69, %v56
  %v71 = vpop.permute.xlu0 %70
  %74 = vset.pattern.permute.xlu0 0
  %75 = vperm.xlu0 %74, %v57
  %v76 = vpop.permute.xlu0 %75
  %vm78 = vcmask 31744
  %v80 = vsel %vm78, %v50, 0
  %v83 = vsel %vm78, %v51, 0
  %v86 = vsel %vm78, %v52, 0
  %v89 = vsel %vm78, %v53, 0
  %vm91 = vcmask 1043456
  %v93 = vsel %vm91, %v49, 0
  %95 = vmatpush.msra.mxu0 0.0
  %96 = vmatpush.msra.mxu0 0.0
  %97 = vmatpush.msra.mxu0 0.0
  %98 = vmatpush.msra.mxu0 0.0
  %99 = vmatpush.msra.mxu0 0.0
  %100 = vmatpush.msra.mxu0 0.0
  %101 = vmatpush.msra.mxu0 0.0
  %102 = vmatpush.msra.mxu0 0.0
  %103 = vmatpush.msra.mxu0 0.0
  %104 = vmatpush.msra.mxu0 0.0
  %105 = vmatpush.msra.mxu0 0.0
  %106 = vmatpush.msra.mxu0 0.0
  %107 = vmatpush.msra.mxu0 0.0
  %108 = vmatpush.msra.mxu0 0.0
  %109 = vmatpush.msra.mxu0 0.0
  %110 = vmatpush.msra.mxu0 %v93
  %111 = vmatmul.f32.gmra.mxu0 %v80
  %v112 = vpop.f32.mrf.mxu0
  %v113 = vadd.f32 %v61, %v112
  %114 = vmatmul.f32.gmra.mxu0 %v83
  %v115 = vpop.f32.mrf.mxu0
  %v116 = vadd.f32 %v66, %v115
  %117 = vmatmul.f32.gmra.mxu0 %v86
  %v118 = vpop.f32.mrf.mxu0
  %v119 = vadd.f32 %v71, %v118
  %120 = vmatmul.f32.gmra.mxu0 %v89
  %v121 = vpop.f32.mrf.mxu0
  %v122 = vadd.f32 %v76, %v121
  %123 = vdwg.mxu0
  %v124 = vld [vmem:[%s3] sm:$0xff]
  %v125 = vld [vmem:[%s3 + $0x8] sm:$0xff]
  %v126 = vld [vmem:[%s3 + $0x10] sm:$0xff]
  %v127 = vld [vmem:[%s3 + $0x18] sm:$0xff]
  %v128 = vld [vmem:[%s4] sm:$0xff]
  %v129 = vld [vmem:[%s4 + $0x8] sm:$0xff]
  %v130 = vld [vmem:[%s4 + $0x10] sm:$0xff]
  %v131 = vld [vmem:[%s4 + $0x18] sm:$0xff]
  %v132 = vld [vmem:[%s5] sm:$0xff]
  %v133 = vld [vmem:[%s5 + $0x8] sm:$0xff]
  %v134 = vld [vmem:[%s5 + $0x10] sm:$0xff]
  %v135 = vld [vmem:[%s5 + $0x18] sm:$0xff]
  %v136 = vld [vmem:[%s6] sm:$0xff]
  %v137 = vld [vmem:[%s6 + $0x8] sm:$0xff]
  %v138 = vld [vmem:[%s6 + $0x10] sm:$0xff]
  %v139 = vld [vmem:[%s6 + $0x18] sm:$0xff]
  %v140 = vld [vmem:[%s6 + $0x20] sm:$0xff]
  %v141 = vld [vmem:[%s6 + $0x28] sm:$0xff]
  %v142 = vld [vmem:[%s6 + $0x30] sm:$0xff]
  %v143 = vld [vmem:[%s6 + $0x38] sm:$0xff]
  %v144 = vld [vmem:[%s7] sm:$0xff]
  %v145 = vld [vmem:[%s7 + $0x8] sm:$0xff]
  %v146 = vld [vmem:[%s7 + $0x10] sm:$0xff]
  %v147 = vld [vmem:[%s7 + $0x18] sm:$0xff]
  %v148 = vld [vmem:[%s7 + $0x20] sm:$0xff]
  %v149 = vld [vmem:[%s7 + $0x28] sm:$0xff]
  %v150 = vld [vmem:[%s7 + $0x30] sm:$0xff]
  %v151 = vld [vmem:[%s7 + $0x38] sm:$0xff]
  %v152 = vld [vmem:[%s8] sm:$0xff]
  %v153 = vld [vmem:[%s8 + $0x8] sm:$0xff]
  %v154 = vld [vmem:[%s8 + $0x10] sm:$0xff]
  %v155 = vld [vmem:[%s8 + $0x18] sm:$0xff]
  %v156 = vld [vmem:[%s8 + $0x20] sm:$0xff]
  %v157 = vld [vmem:[%s8 + $0x28] sm:$0xff]
  %v158 = vld [vmem:[%s8 + $0x30] sm:$0xff]
  %v159 = vld [vmem:[%s8 + $0x38] sm:$0xff]
  %v160 = vld [vmem:[%s9] sm:$0xff]
  %v161 = vld [vmem:[%s9 + $0x8] sm:$0xff]
  %v162 = vld [vmem:[%s9 + $0x10] sm:$0xff]
  %v163 = vld [vmem:[%s9 + $0x18] sm:$0xff]
  %v164 = vld [vmem:[%s10] sm:$0xff]
  %v165 = vld [vmem:[%s10 + $0x8] sm:$0xff]
  %v166 = vld [vmem:[%s10 + $0x10] sm:$0xff]
  %v167 = vld [vmem:[%s10 + $0x18] sm:$0xff]
  %v168 = vld [vmem:[%s11] sm:$0xff]
  %v169 = vld [vmem:[%s11 + $0x8] sm:$0xff]
  %v170 = vld [vmem:[%s11 + $0x10] sm:$0xff]
  %v171 = vld [vmem:[%s11 + $0x18] sm:$0xff]
  %v172 = vadd.f32 %v113, %v116
  %v173 = vadd.f32 %v172, %v119
  %v174 = vadd.f32 %v173, %v122
  %v175 = vrot.slane %v174, 4
  %v176 = vadd.f32 %v174, %v175
  %v177 = vrot.slane %v176, 2
  %v178 = vadd.f32 %v176, %v177
  %v179 = vrot.slane %v178, 1
  %v180 = vadd.f32 %v178, %v179
  %v181 = vmul.f32 %v180, 0.03125
  %v182 = vsub.f32 %v113, %v181
  %v183 = vsub.f32 %v116, %v181
  %v184 = vsub.f32 %v119, %v181
  %v185 = vsub.f32 %v122, %v181
  %v186 = vmul.f32 %v182, %v182
  %v187 = vmul.f32 %v183, %v183
  %v188 = vmul.f32 %v184, %v184
  %v189 = vmul.f32 %v185, %v185
  %v190 = vadd.f32 %v186, %v187
  %v191 = vadd.f32 %v190, %v188
  %v192 = vadd.f32 %v191, %v189
  %v193 = vrot.slane %v192, 4
  %v194 = vadd.f32 %v192, %v193
  %v195 = vrot.slane %v194, 2
  %v196 = vadd.f32 %v194, %v195
  %v197 = vrot.slane %v196, 1
  %v198 = vadd.f32 %v196, %v197
  %v199 = vmul.f32 %v198, 0.03125
  %v200 = vadd.f32 %v199, 1e-05
  %v201 = vrsqrt.pop %v200
  %v202 = vmul.f32 %v201, %v200
  %v203 = vmul.f32 %v202, %v201
  %v204 = vmul.f32 0.5, %v203
  %v205 = vsub.f32 1.5, %v204
  %v206 = vmul.f32 %v201, %v205
  %vm207 = vweird.f32 %v200
  %vm208 = vweird.f32 %v201
  %vm209 = vmor %vm207, %vm208
  %v210 = vsel %vm209, %v201, %v206
  %v211 = vmul.f32 %v182, %v210
  %v212 = vmul.f32 %v183, %v210
  %v213 = vmul.f32 %v184, %v210
  %v214 = vmul.f32 %v185, %v210
  %216 = vset.pattern.permute.xlu0 0
  %217 = vperm.xlu0 %216, %v124
  %v218 = vpop.permute.xlu0 %217
  %221 = vset.pattern.permute.xlu0 0
  %222 = vperm.xlu0 %221, %v125
  %v223 = vpop.permute.xlu0 %222
  %226 = vset.pattern.permute.xlu0 0
  %227 = vperm.xlu0 %226, %v126
  %v228 = vpop.permute.xlu0 %227
  %231 = vset.pattern.permute.xlu0 0
  %232 = vperm.xlu0 %231, %v127
  %v233 = vpop.permute.xlu0 %232
  %v235 = vmul.f32 %v211, %v218
  %v236 = vmul.f32 %v212, %v223
  %v237 = vmul.f32 %v213, %v228
  %v238 = vmul.f32 %v214, %v233
  %240 = vset.pattern.permute.xlu0 0
  %241 = vperm.xlu0 %240, %v128
  %v242 = vpop.permute.xlu0 %241
  %245 = vset.pattern.permute.xlu0 0
  %246 = vperm.xlu0 %245, %v129
  %v247 = vpop.permute.xlu0 %246
  %250 = vset.pattern.permute.xlu0 0
  %251 = vperm.xlu0 %250, %v130
  %v252 = vpop.permute.xlu0 %251
  %255 = vset.pattern.permute.xlu0 0
  %256 = vperm.xlu0 %255, %v131
  %v257 = vpop.permute.xlu0 %256
  %v259 = vadd.f32 %v235, %v242
  %v260 = vadd.f32 %v236, %v247
  %v261 = vadd.f32 %v237, %v252
  %v262 = vadd.f32 %v238, %v257
  %264 = vset.pattern.permute.xlu0 0
  %265 = vperm.xlu0 %264, %v132
  %v266 = vpop.permute.xlu0 %265
  %269 = vset.pattern.permute.xlu0 0
  %270 = vperm.xlu0 %269, %v133
  %v271 = vpop.permute.xlu0 %270
  %274 = vset.pattern.permute.xlu0 0
  %275 = vperm.xlu0 %274, %v134
  %v276 = vpop.permute.xlu0 %275
  %279 = vset.pattern.permute.xlu0 0
  %280 = vperm.xlu0 %279, %v135
  %v281 = vpop.permute.xlu0 %280
  %v283 = vmul.f32 %v266, %v259
  %v284 = vmul.f32 %v271, %v260
  %v285 = vmul.f32 %v276, %v261
  %v286 = vmul.f32 %v281, %v262
  %v287 = vsub.f32 0.0, %v283
  %v288 = vsub.f32 0.0, %v284
  %v289 = vsub.f32 0.0, %v285
  %v290 = vsub.f32 0.0, %v286
  %v291 = vmul.f32 %v287, 1.442695
  %v292 = vpow.pop %v291
  %v293 = vmul.f32 %v288, 1.442695
  %v294 = vpow.pop %v293
  %v295 = vmul.f32 %v289, 1.442695
  %v296 = vpow.pop %v295
  %v297 = vmul.f32 %v290, 1.442695
  %v298 = vpow.pop %v297
  %v299 = vadd.f32 %v292, 1.0
  %v300 = vadd.f32 %v294, 1.0
  %v301 = vadd.f32 %v296, 1.0
  %v302 = vadd.f32 %v298, 1.0
  %v303 = vrcp.pop %v299
  %v304 = vrcp.pop %v300
  %v305 = vrcp.pop %v301
  %v306 = vrcp.pop %v302
  %v307 = vmul.f32 %v259, %v303
  %v308 = vmul.f32 %v260, %v304
  %v309 = vmul.f32 %v261, %v305
  %v310 = vmul.f32 %v262, %v306
  %312 = vset.pattern.permute.xlu0 0
  %313 = vperm.xlu0 %312, %v144
  %v314 = vpop.permute.xlu0 %313
  %317 = vset.pattern.permute.xlu0 0
  %318 = vperm.xlu0 %317, %v145
  %v319 = vpop.permute.xlu0 %318
  %322 = vset.pattern.permute.xlu0 0
  %323 = vperm.xlu0 %322, %v146
  %v324 = vpop.permute.xlu0 %323
  %327 = vset.pattern.permute.xlu0 0
  %328 = vperm.xlu0 %327, %v147
  %v329 = vpop.permute.xlu0 %328
  %332 = vset.pattern.permute.xlu0 0
  %333 = vperm.xlu0 %332, %v148
  %v334 = vpop.permute.xlu0 %333
  %337 = vset.pattern.permute.xlu0 0
  %338 = vperm.xlu0 %337, %v149
  %v339 = vpop.permute.xlu0 %338
  %342 = vset.pattern.permute.xlu0 0
  %343 = vperm.xlu0 %342, %v150
  %v344 = vpop.permute.xlu0 %343
  %347 = vset.pattern.permute.xlu0 0
  %348 = vperm.xlu0 %347, %v151
  %v349 = vpop.permute.xlu0 %348
  %vm351 = vcmask 261120
  %v353 = vsel %vm351, %v136, 0
  %v356 = vsel %vm351, %v137, 0
  %v359 = vsel %vm351, %v138, 0
  %v362 = vsel %vm351, %v139, 0
  %v365 = vsel %vm351, %v140, 0
  %v368 = vsel %vm351, %v141, 0
  %v371 = vsel %vm351, %v142, 0
  %v374 = vsel %vm351, %v143, 0
  %376 = vmatpush.msra.mxu0 0.0
  %377 = vmatpush.msra.mxu0 0.0
  %378 = vmatpush.msra.mxu0 0.0
  %379 = vmatpush.msra.mxu0 0.0
  %380 = vmatpush.msra.mxu0 0.0
  %381 = vmatpush.msra.mxu0 0.0
  %382 = vmatpush.msra.mxu0 0.0
  %383 = vmatpush.msra.mxu0 0.0
  %384 = vmatpush.msra.mxu0 0.0
  %385 = vmatpush.msra.mxu0 0.0
  %386 = vmatpush.msra.mxu0 0.0
  %387 = vmatpush.msra.mxu0 0.0
  %388 = vmatpush.msra.mxu0 %v310
  %389 = vmatpush.msra.mxu0 %v309
  %390 = vmatpush.msra.mxu0 %v308
  %391 = vmatpush.msra.mxu0 %v307
  %392 = vmatmul.f32.gmra.mxu0 %v353
  %v393 = vpop.f32.mrf.mxu0
  %v394 = vadd.f32 %v314, %v393
  %395 = vmatmul.f32.gmra.mxu0 %v356
  %v396 = vpop.f32.mrf.mxu0
  %v397 = vadd.f32 %v319, %v396
  %398 = vmatmul.f32.gmra.mxu0 %v359
  %v399 = vpop.f32.mrf.mxu0
  %v400 = vadd.f32 %v324, %v399
  %401 = vmatmul.f32.gmra.mxu0 %v362
  %v402 = vpop.f32.mrf.mxu0
  %v403 = vadd.f32 %v329, %v402
  %404 = vmatmul.f32.gmra.mxu0 %v365
  %v405 = vpop.f32.mrf.mxu0
  %v406 = vadd.f32 %v334, %v405
  %407 = vmatmul.f32.gmra.mxu0 %v368
  %v408 = vpop.f32.mrf.mxu0
  %v409 = vadd.f32 %v339, %v408
  %410 = vmatmul.f32.gmra.mxu0 %v371
  %v411 = vpop.f32.mrf.mxu0
  %v412 = vadd.f32 %v344, %v411
  %413 = vmatmul.f32.gmra.mxu0 %v374
  %v414 = vpop.f32.mrf.mxu0
  %v415 = vadd.f32 %v349, %v414
  %416 = vdwg.mxu0
  %418 = vset.pattern.permute.xlu0 0
  %419 = vperm.xlu0 %418, %v152
  %v420 = vpop.permute.xlu0 %419
  %423 = vset.pattern.permute.xlu0 0
  %424 = vperm.xlu0 %423, %v153
  %v425 = vpop.permute.xlu0 %424
  %428 = vset.pattern.permute.xlu0 0
  %429 = vperm.xlu0 %428, %v154
  %v430 = vpop.permute.xlu0 %429
  %433 = vset.pattern.permute.xlu0 0
  %434 = vperm.xlu0 %433, %v155
  %v435 = vpop.permute.xlu0 %434
  %438 = vset.pattern.permute.xlu0 0
  %439 = vperm.xlu0 %438, %v156
  %v440 = vpop.permute.xlu0 %439
  %443 = vset.pattern.permute.xlu0 0
  %444 = vperm.xlu0 %443, %v157
  %v445 = vpop.permute.xlu0 %444
  %448 = vset.pattern.permute.xlu0 0
  %449 = vperm.xlu0 %448, %v158
  %v450 = vpop.permute.xlu0 %449
  %453 = vset.pattern.permute.xlu0 0
  %454 = vperm.xlu0 %453, %v159
  %v455 = vpop.permute.xlu0 %454
  %v457 = vmul.f32 %v420, %v394
  %v458 = vmul.f32 %v425, %v397
  %v459 = vmul.f32 %v430, %v400
  %v460 = vmul.f32 %v435, %v403
  %v461 = vmul.f32 %v440, %v406
  %v462 = vmul.f32 %v445, %v409
  %v463 = vmul.f32 %v450, %v412
  %v464 = vmul.f32 %v455, %v415
  %v465 = vsub.f32 0.0, %v457
  %v466 = vsub.f32 0.0, %v458
  %v467 = vsub.f32 0.0, %v459
  %v468 = vsub.f32 0.0, %v460
  %v469 = vsub.f32 0.0, %v461
  %v470 = vsub.f32 0.0, %v462
  %v471 = vsub.f32 0.0, %v463
  %v472 = vsub.f32 0.0, %v464
  %v473 = vmul.f32 %v465, 1.442695
  %v474 = vpow.pop %v473
  %v475 = vmul.f32 %v466, 1.442695
  %v476 = vpow.pop %v475
  %v477 = vmul.f32 %v467, 1.442695
  %v478 = vpow.pop %v477
  %v479 = vmul.f32 %v468, 1.442695
  %v480 = vpow.pop %v479
  %v481 = vmul.f32 %v469, 1.442695
  %v482 = vpow.pop %v481
  %v483 = vmul.f32 %v470, 1.442695
  %v484 = vpow.pop %v483
  %v485 = vmul.f32 %v471, 1.442695
  %v486 = vpow.pop %v485
  %v487 = vmul.f32 %v472, 1.442695
  %v488 = vpow.pop %v487
  %v489 = vadd.f32 %v474, 1.0
  %v490 = vadd.f32 %v476, 1.0
  %v491 = vadd.f32 %v478, 1.0
  %v492 = vadd.f32 %v480, 1.0
  %v493 = vadd.f32 %v482, 1.0
  %v494 = vadd.f32 %v484, 1.0
  %v495 = vadd.f32 %v486, 1.0
  %v496 = vadd.f32 %v488, 1.0
  %v497 = vrcp.pop %v489
  %v498 = vrcp.pop %v490
  %v499 = vrcp.pop %v491
  %v500 = vrcp.pop %v492
  %v501 = vrcp.pop %v493
  %v502 = vrcp.pop %v494
  %v503 = vrcp.pop %v495
  %v504 = vrcp.pop %v496
  %v505 = vmul.f32 %v394, %v497
  %v506 = vmul.f32 %v397, %v498
  %v507 = vmul.f32 %v400, %v499
  %v508 = vmul.f32 %v403, %v500
  %v509 = vmul.f32 %v406, %v501
  %v510 = vmul.f32 %v409, %v502
  %v511 = vmul.f32 %v412, %v503
  %v512 = vmul.f32 %v415, %v504
  %514 = vset.pattern.permute.xlu0 0
  %515 = vperm.xlu0 %514, %v164
  %v516 = vpop.permute.xlu0 %515
  %519 = vset.pattern.permute.xlu0 0
  %520 = vperm.xlu0 %519, %v165
  %v521 = vpop.permute.xlu0 %520
  %524 = vset.pattern.permute.xlu0 0
  %525 = vperm.xlu0 %524, %v166
  %v526 = vpop.permute.xlu0 %525
  %529 = vset.pattern.permute.xlu0 0
  %530 = vperm.xlu0 %529, %v167
  %v531 = vpop.permute.xlu0 %530
  %vm533 = vcmask 523264
  %v535 = vsel %vm533, %v160, 0
  %v538 = vsel %vm533, %v161, 0
  %v541 = vsel %vm533, %v162, 0
  %v544 = vsel %vm533, %v163, 0
  %546 = vmatpush.msra.mxu0 0.0
  %547 = vmatpush.msra.mxu0 0.0
  %548 = vmatpush.msra.mxu0 0.0
  %549 = vmatpush.msra.mxu0 0.0
  %550 = vmatpush.msra.mxu0 0.0
  %551 = vmatpush.msra.mxu0 0.0
  %552 = vmatpush.msra.mxu0 0.0
  %553 = vmatpush.msra.mxu0 0.0
  %554 = vmatpush.msra.mxu0 %v512
  %555 = vmatpush.msra.mxu0 %v511
  %556 = vmatpush.msra.mxu0 %v510
  %557 = vmatpush.msra.mxu0 %v509
  %558 = vmatpush.msra.mxu0 %v508
  %559 = vmatpush.msra.mxu0 %v507
  %560 = vmatpush.msra.mxu0 %v506
  %561 = vmatpush.msra.mxu0 %v505
  %562 = vmatmul.f32.gmra.mxu0 %v535
  %v563 = vpop.f32.mrf.mxu0
  %v564 = vadd.f32 %v516, %v563
  %565 = vmatmul.f32.gmra.mxu0 %v538
  %v566 = vpop.f32.mrf.mxu0
  %v567 = vadd.f32 %v521, %v566
  %568 = vmatmul.f32.gmra.mxu0 %v541
  %v569 = vpop.f32.mrf.mxu0
  %v570 = vadd.f32 %v526, %v569
  %571 = vmatmul.f32.gmra.mxu0 %v544
  %v572 = vpop.f32.mrf.mxu0
  %v573 = vadd.f32 %v531, %v572
  %574 = vdwg.mxu0
  %576 = vset.pattern.permute.xlu0 0
  %577 = vperm.xlu0 %576, %v168
  %v578 = vpop.permute.xlu0 %577
  %581 = vset.pattern.permute.xlu0 0
  %582 = vperm.xlu0 %581, %v169
  %v583 = vpop.permute.xlu0 %582
  %586 = vset.pattern.permute.xlu0 0
  %587 = vperm.xlu0 %586, %v170
  %v588 = vpop.permute.xlu0 %587
  %591 = vset.pattern.permute.xlu0 0
  %592 = vperm.xlu0 %591, %v171
  %v593 = vpop.permute.xlu0 %592
  %v595 = vmul.f32 %v578, %v564
  %v596 = vmul.f32 %v583, %v567
  %v597 = vmul.f32 %v588, %v570
  %v598 = vmul.f32 %v593, %v573
  %v599 = vsub.f32 0.0, %v595
  %v600 = vsub.f32 0.0, %v596
  %v601 = vsub.f32 0.0, %v597
  %v602 = vsub.f32 0.0, %v598
  %v603 = vmul.f32 %v599, 1.442695
  %v604 = vpow.pop %v603
  %v605 = vmul.f32 %v600, 1.442695
  %v606 = vpow.pop %v605
  %v607 = vmul.f32 %v601, 1.442695
  %v608 = vpow.pop %v607
  %v609 = vmul.f32 %v602, 1.442695
  %v610 = vpow.pop %v609
  %v611 = vadd.f32 %v604, 1.0
  %v612 = vadd.f32 %v606, 1.0
  %v613 = vadd.f32 %v608, 1.0
  %v614 = vadd.f32 %v610, 1.0
  %v615 = vrcp.pop %v611
  %v616 = vrcp.pop %v612
  %v617 = vrcp.pop %v613
  %v618 = vrcp.pop %v614
  %v619 = vmul.f32 %v564, %v615
  %v620 = vmul.f32 %v567, %v616
  %v621 = vmul.f32 %v570, %v617
  %v622 = vmul.f32 %v573, %v618
  %v623 = vadd.f32 %v619, %v113
  %v624 = vadd.f32 %v620, %v116
  %v625 = vadd.f32 %v621, %v119
  %v626 = vadd.f32 %v622, %v122
  %s627 = scalar_lea.vmem %s3, 32
  %v628 = vld [vmem:[%s627] sm:$0xff]
  %v629 = vld [vmem:[%s627 + $0x8] sm:$0xff]
  %v630 = vld [vmem:[%s627 + $0x10] sm:$0xff]
  %v631 = vld [vmem:[%s627 + $0x18] sm:$0xff]
  %s632 = scalar_lea.vmem %s4, 32
  %v633 = vld [vmem:[%s632] sm:$0xff]
  %v634 = vld [vmem:[%s632 + $0x8] sm:$0xff]
  %v635 = vld [vmem:[%s632 + $0x10] sm:$0xff]
  %v636 = vld [vmem:[%s632 + $0x18] sm:$0xff]
  %s637 = scalar_lea.vmem %s5, 32
  %v638 = vld [vmem:[%s637] sm:$0xff]
  %v639 = vld [vmem:[%s637 + $0x8] sm:$0xff]
  %v640 = vld [vmem:[%s637 + $0x10] sm:$0xff]
  %v641 = vld [vmem:[%s637 + $0x18] sm:$0xff]
  %s642 = scalar_lea.vmem %s6, 64
  %v643 = vld [vmem:[%s642] sm:$0xff]
  %v644 = vld [vmem:[%s642 + $0x8] sm:$0xff]
  %v645 = vld [vmem:[%s642 + $0x10] sm:$0xff]
  %v646 = vld [vmem:[%s642 + $0x18] sm:$0xff]
  %v647 = vld [vmem:[%s642 + $0x20] sm:$0xff]
  %v648 = vld [vmem:[%s642 + $0x28] sm:$0xff]
  %v649 = vld [vmem:[%s642 + $0x30] sm:$0xff]
  %v650 = vld [vmem:[%s642 + $0x38] sm:$0xff]
  %s651 = scalar_lea.vmem %s7, 64
  %v652 = vld [vmem:[%s651] sm:$0xff]
  %v653 = vld [vmem:[%s651 + $0x8] sm:$0xff]
  %v654 = vld [vmem:[%s651 + $0x10] sm:$0xff]
  %v655 = vld [vmem:[%s651 + $0x18] sm:$0xff]
  %v656 = vld [vmem:[%s651 + $0x20] sm:$0xff]
  %v657 = vld [vmem:[%s651 + $0x28] sm:$0xff]
  %v658 = vld [vmem:[%s651 + $0x30] sm:$0xff]
  %v659 = vld [vmem:[%s651 + $0x38] sm:$0xff]
  %s660 = scalar_lea.vmem %s8, 64
  %v661 = vld [vmem:[%s660] sm:$0xff]
  %v662 = vld [vmem:[%s660 + $0x8] sm:$0xff]
  %v663 = vld [vmem:[%s660 + $0x10] sm:$0xff]
  %v664 = vld [vmem:[%s660 + $0x18] sm:$0xff]
  %v665 = vld [vmem:[%s660 + $0x20] sm:$0xff]
  %v666 = vld [vmem:[%s660 + $0x28] sm:$0xff]
  %v667 = vld [vmem:[%s660 + $0x30] sm:$0xff]
  %v668 = vld [vmem:[%s660 + $0x38] sm:$0xff]
  %s669 = scalar_lea.vmem %s9, 32
  %v670 = vld [vmem:[%s669] sm:$0xff]
  %v671 = vld [vmem:[%s669 + $0x8] sm:$0xff]
  %v672 = vld [vmem:[%s669 + $0x10] sm:$0xff]
  %v673 = vld [vmem:[%s669 + $0x18] sm:$0xff]
  %s674 = scalar_lea.vmem %s10, 32
  %v675 = vld [vmem:[%s674] sm:$0xff]
  %v676 = vld [vmem:[%s674 + $0x8] sm:$0xff]
  %v677 = vld [vmem:[%s674 + $0x10] sm:$0xff]
  %v678 = vld [vmem:[%s674 + $0x18] sm:$0xff]
  %s679 = scalar_lea.vmem %s11, 32
  %v680 = vld [vmem:[%s679] sm:$0xff]
  %v681 = vld [vmem:[%s679 + $0x8] sm:$0xff]
  %v682 = vld [vmem:[%s679 + $0x10] sm:$0xff]
  %v683 = vld [vmem:[%s679 + $0x18] sm:$0xff]
  %v684 = vadd.f32 %v623, %v624
  %v685 = vadd.f32 %v684, %v625
  %v686 = vadd.f32 %v685, %v626
  %v687 = vrot.slane %v686, 4
  %v688 = vadd.f32 %v686, %v687
  %v689 = vrot.slane %v688, 2
  %v690 = vadd.f32 %v688, %v689
  %v691 = vrot.slane %v690, 1
  %v692 = vadd.f32 %v690, %v691
  %v693 = vmul.f32 %v692, 0.03125
  %v694 = vsub.f32 %v623, %v693
  %v695 = vsub.f32 %v624, %v693
  %v696 = vsub.f32 %v625, %v693
  %v697 = vsub.f32 %v626, %v693
  %v698 = vmul.f32 %v694, %v694
  %v699 = vmul.f32 %v695, %v695
  %v700 = vmul.f32 %v696, %v696
  %v701 = vmul.f32 %v697, %v697
  %v702 = vadd.f32 %v698, %v699
  %v703 = vadd.f32 %v702, %v700
  %v704 = vadd.f32 %v703, %v701
  %v705 = vrot.slane %v704, 4
  %v706 = vadd.f32 %v704, %v705
  %v707 = vrot.slane %v706, 2
  %v708 = vadd.f32 %v706, %v707
  %v709 = vrot.slane %v708, 1
  %v710 = vadd.f32 %v708, %v709
  %v711 = vmul.f32 %v710, 0.03125
  %v712 = vadd.f32 %v711, 1e-05
  %v713 = vrsqrt.pop %v712
  %v714 = vmul.f32 %v713, %v712
  %v715 = vmul.f32 %v714, %v713
  %v716 = vmul.f32 0.5, %v715
  %v717 = vsub.f32 1.5, %v716
  %v718 = vmul.f32 %v713, %v717
  %vm719 = vweird.f32 %v712
  %vm720 = vweird.f32 %v713
  %vm721 = vmor %vm719, %vm720
  %v722 = vsel %vm721, %v713, %v718
  %v723 = vmul.f32 %v694, %v722
  %v724 = vmul.f32 %v695, %v722
  %v725 = vmul.f32 %v696, %v722
  %v726 = vmul.f32 %v697, %v722
  %728 = vset.pattern.permute.xlu0 0
  %729 = vperm.xlu0 %728, %v628
  %v730 = vpop.permute.xlu0 %729
  %733 = vset.pattern.permute.xlu0 0
  %734 = vperm.xlu0 %733, %v629
  %v735 = vpop.permute.xlu0 %734
  %738 = vset.pattern.permute.xlu0 0
  %739 = vperm.xlu0 %738, %v630
  %v740 = vpop.permute.xlu0 %739
  %743 = vset.pattern.permute.xlu0 0
  %744 = vperm.xlu0 %743, %v631
  %v745 = vpop.permute.xlu0 %744
  %v747 = vmul.f32 %v723, %v730
  %v748 = vmul.f32 %v724, %v735
  %v749 = vmul.f32 %v725, %v740
  %v750 = vmul.f32 %v726, %v745
  %752 = vset.pattern.permute.xlu0 0
  %753 = vperm.xlu0 %752, %v633
  %v754 = vpop.permute.xlu0 %753
  %757 = vset.pattern.permute.xlu0 0
  %758 = vperm.xlu0 %757, %v634
  %v759 = vpop.permute.xlu0 %758
  %762 = vset.pattern.permute.xlu0 0
  %763 = vperm.xlu0 %762, %v635
  %v764 = vpop.permute.xlu0 %763
  %767 = vset.pattern.permute.xlu0 0
  %768 = vperm.xlu0 %767, %v636
  %v769 = vpop.permute.xlu0 %768
  %v771 = vadd.f32 %v747, %v754
  %v772 = vadd.f32 %v748, %v759
  %v773 = vadd.f32 %v749, %v764
  %v774 = vadd.f32 %v750, %v769
  %776 = vset.pattern.permute.xlu0 0
  %777 = vperm.xlu0 %776, %v638
  %v778 = vpop.permute.xlu0 %777
  %781 = vset.pattern.permute.xlu0 0
  %782 = vperm.xlu0 %781, %v639
  %v783 = vpop.permute.xlu0 %782
  %786 = vset.pattern.permute.xlu0 0
  %787 = vperm.xlu0 %786, %v640
  %v788 = vpop.permute.xlu0 %787
  %791 = vset.pattern.permute.xlu0 0
  %792 = vperm.xlu0 %791, %v641
  %v793 = vpop.permute.xlu0 %792
  %v795 = vmul.f32 %v778, %v771
  %v796 = vmul.f32 %v783, %v772
  %v797 = vmul.f32 %v788, %v773
  %v798 = vmul.f32 %v793, %v774
  %v799 = vsub.f32 0.0, %v795
  %v800 = vsub.f32 0.0, %v796
  %v801 = vsub.f32 0.0, %v797
  %v802 = vsub.f32 0.0, %v798
  %v803 = vmul.f32 %v799, 1.442695
  %v804 = vpow.pop %v803
  %v805 = vmul.f32 %v800, 1.442695
  %v806 = vpow.pop %v805
  %v807 = vmul.f32 %v801, 1.442695
  %v808 = vpow.pop %v807
  %v809 = vmul.f32 %v802, 1.442695
  %v810 = vpow.pop %v809
  %v811 = vadd.f32 %v804, 1.0
  %v812 = vadd.f32 %v806, 1.0
  %v813 = vadd.f32 %v808, 1.0
  %v814 = vadd.f32 %v810, 1.0
  %v815 = vrcp.pop %v811
  %v816 = vrcp.pop %v812
  %v817 = vrcp.pop %v813
  %v818 = vrcp.pop %v814
  %v819 = vmul.f32 %v771, %v815
  %v820 = vmul.f32 %v772, %v816
  %v821 = vmul.f32 %v773, %v817
  %v822 = vmul.f32 %v774, %v818
  %824 = vset.pattern.permute.xlu0 0
  %825 = vperm.xlu0 %824, %v652
  %v826 = vpop.permute.xlu0 %825
  %829 = vset.pattern.permute.xlu0 0
  %830 = vperm.xlu0 %829, %v653
  %v831 = vpop.permute.xlu0 %830
  %834 = vset.pattern.permute.xlu0 0
  %835 = vperm.xlu0 %834, %v654
  %v836 = vpop.permute.xlu0 %835
  %839 = vset.pattern.permute.xlu0 0
  %840 = vperm.xlu0 %839, %v655
  %v841 = vpop.permute.xlu0 %840
  %844 = vset.pattern.permute.xlu0 0
  %845 = vperm.xlu0 %844, %v656
  %v846 = vpop.permute.xlu0 %845
  %849 = vset.pattern.permute.xlu0 0
  %850 = vperm.xlu0 %849, %v657
  %v851 = vpop.permute.xlu0 %850
  %854 = vset.pattern.permute.xlu0 0
  %855 = vperm.xlu0 %854, %v658
  %v856 = vpop.permute.xlu0 %855
  %859 = vset.pattern.permute.xlu0 0
  %860 = vperm.xlu0 %859, %v659
  %v861 = vpop.permute.xlu0 %860
  %v864 = vsel %vm351, %v643, 0
  %v867 = vsel %vm351, %v644, 0
  %v870 = vsel %vm351, %v645, 0
  %v873 = vsel %vm351, %v646, 0
  %v876 = vsel %vm351, %v647, 0
  %v879 = vsel %vm351, %v648, 0
  %v882 = vsel %vm351, %v649, 0
  %v885 = vsel %vm351, %v650, 0
  %887 = vmatpush.msra.mxu0 0.0
  %888 = vmatpush.msra.mxu0 0.0
  %889 = vmatpush.msra.mxu0 0.0
  %890 = vmatpush.msra.mxu0 0.0
  %891 = vmatpush.msra.mxu0 0.0
  %892 = vmatpush.msra.mxu0 0.0
  %893 = vmatpush.msra.mxu0 0.0
  %894 = vmatpush.msra.mxu0 0.0
  %895 = vmatpush.msra.mxu0 0.0
  %896 = vmatpush.msra.mxu0 0.0
  %897 = vmatpush.msra.mxu0 0.0
  %898 = vmatpush.msra.mxu0 0.0
  %899 = vmatpush.msra.mxu0 %v822
  %900 = vmatpush.msra.mxu0 %v821
  %901 = vmatpush.msra.mxu0 %v820
  %902 = vmatpush.msra.mxu0 %v819
  %903 = vmatmul.f32.gmra.mxu0 %v864
  %v904 = vpop.f32.mrf.mxu0
  %v905 = vadd.f32 %v826, %v904
  %906 = vmatmul.f32.gmra.mxu0 %v867
  %v907 = vpop.f32.mrf.mxu0
  %v908 = vadd.f32 %v831, %v907
  %909 = vmatmul.f32.gmra.mxu0 %v870
  %v910 = vpop.f32.mrf.mxu0
  %v911 = vadd.f32 %v836, %v910
  %912 = vmatmul.f32.gmra.mxu0 %v873
  %v913 = vpop.f32.mrf.mxu0
  %v914 = vadd.f32 %v841, %v913
  %915 = vmatmul.f32.gmra.mxu0 %v876
  %v916 = vpop.f32.mrf.mxu0
  %v917 = vadd.f32 %v846, %v916
  %918 = vmatmul.f32.gmra.mxu0 %v879
  %v919 = vpop.f32.mrf.mxu0
  %v920 = vadd.f32 %v851, %v919
  %921 = vmatmul.f32.gmra.mxu0 %v882
  %v922 = vpop.f32.mrf.mxu0
  %v923 = vadd.f32 %v856, %v922
  %924 = vmatmul.f32.gmra.mxu0 %v885
  %v925 = vpop.f32.mrf.mxu0
  %v926 = vadd.f32 %v861, %v925
  %927 = vdwg.mxu0
  %929 = vset.pattern.permute.xlu0 0
  %930 = vperm.xlu0 %929, %v661
  %v931 = vpop.permute.xlu0 %930
  %934 = vset.pattern.permute.xlu0 0
  %935 = vperm.xlu0 %934, %v662
  %v936 = vpop.permute.xlu0 %935
  %939 = vset.pattern.permute.xlu0 0
  %940 = vperm.xlu0 %939, %v663
  %v941 = vpop.permute.xlu0 %940
  %944 = vset.pattern.permute.xlu0 0
  %945 = vperm.xlu0 %944, %v664
  %v946 = vpop.permute.xlu0 %945
  %949 = vset.pattern.permute.xlu0 0
  %950 = vperm.xlu0 %949, %v665
  %v951 = vpop.permute.xlu0 %950
  %954 = vset.pattern.permute.xlu0 0
  %955 = vperm.xlu0 %954, %v666
  %v956 = vpop.permute.xlu0 %955
  %959 = vset.pattern.permute.xlu0 0
  %960 = vperm.xlu0 %959, %v667
  %v961 = vpop.permute.xlu0 %960
  %964 = vset.pattern.permute.xlu0 0
  %965 = vperm.xlu0 %964, %v668
  %v966 = vpop.permute.xlu0 %965
  %v968 = vmul.f32 %v931, %v905
  %v969 = vmul.f32 %v936, %v908
  %v970 = vmul.f32 %v941, %v911
  %v971 = vmul.f32 %v946, %v914
  %v972 = vmul.f32 %v951, %v917
  %v973 = vmul.f32 %v956, %v920
  %v974 = vmul.f32 %v961, %v923
  %v975 = vmul.f32 %v966, %v926
  %v976 = vsub.f32 0.0, %v968
  %v977 = vsub.f32 0.0, %v969
  %v978 = vsub.f32 0.0, %v970
  %v979 = vsub.f32 0.0, %v971
  %v980 = vsub.f32 0.0, %v972
  %v981 = vsub.f32 0.0, %v973
  %v982 = vsub.f32 0.0, %v974
  %v983 = vsub.f32 0.0, %v975
  %v984 = vmul.f32 %v976, 1.442695
  %v985 = vpow.pop %v984
  %v986 = vmul.f32 %v977, 1.442695
  %v987 = vpow.pop %v986
  %v988 = vmul.f32 %v978, 1.442695
  %v989 = vpow.pop %v988
  %v990 = vmul.f32 %v979, 1.442695
  %v991 = vpow.pop %v990
  %v992 = vmul.f32 %v980, 1.442695
  %v993 = vpow.pop %v992
  %v994 = vmul.f32 %v981, 1.442695
  %v995 = vpow.pop %v994
  %v996 = vmul.f32 %v982, 1.442695
  %v997 = vpow.pop %v996
  %v998 = vmul.f32 %v983, 1.442695
  %v999 = vpow.pop %v998
  %v1000 = vadd.f32 %v985, 1.0
  %v1001 = vadd.f32 %v987, 1.0
  %v1002 = vadd.f32 %v989, 1.0
  %v1003 = vadd.f32 %v991, 1.0
  %v1004 = vadd.f32 %v993, 1.0
  %v1005 = vadd.f32 %v995, 1.0
  %v1006 = vadd.f32 %v997, 1.0
  %v1007 = vadd.f32 %v999, 1.0
  %v1008 = vrcp.pop %v1000
  %v1009 = vrcp.pop %v1001
  %v1010 = vrcp.pop %v1002
  %v1011 = vrcp.pop %v1003
  %v1012 = vrcp.pop %v1004
  %v1013 = vrcp.pop %v1005
  %v1014 = vrcp.pop %v1006
  %v1015 = vrcp.pop %v1007
  %v1016 = vmul.f32 %v905, %v1008
  %v1017 = vmul.f32 %v908, %v1009
  %v1018 = vmul.f32 %v911, %v1010
  %v1019 = vmul.f32 %v914, %v1011
  %v1020 = vmul.f32 %v917, %v1012
  %v1021 = vmul.f32 %v920, %v1013
  %v1022 = vmul.f32 %v923, %v1014
  %v1023 = vmul.f32 %v926, %v1015
  %1025 = vset.pattern.permute.xlu0 0
  %1026 = vperm.xlu0 %1025, %v675
  %v1027 = vpop.permute.xlu0 %1026
  %1030 = vset.pattern.permute.xlu0 0
  %1031 = vperm.xlu0 %1030, %v676
  %v1032 = vpop.permute.xlu0 %1031
  %1035 = vset.pattern.permute.xlu0 0
  %1036 = vperm.xlu0 %1035, %v677
  %v1037 = vpop.permute.xlu0 %1036
  %1040 = vset.pattern.permute.xlu0 0
  %1041 = vperm.xlu0 %1040, %v678
  %v1042 = vpop.permute.xlu0 %1041
  %v1045 = vsel %vm533, %v670, 0
  %v1048 = vsel %vm533, %v671, 0
  %v1051 = vsel %vm533, %v672, 0
  %v1054 = vsel %vm533, %v673, 0
  %1056 = vmatpush.msra.mxu0 0.0
  %1057 = vmatpush.msra.mxu0 0.0
  %1058 = vmatpush.msra.mxu0 0.0
  %1059 = vmatpush.msra.mxu0 0.0
  %1060 = vmatpush.msra.mxu0 0.0
  %1061 = vmatpush.msra.mxu0 0.0
  %1062 = vmatpush.msra.mxu0 0.0
  %1063 = vmatpush.msra.mxu0 0.0
  %1064 = vmatpush.msra.mxu0 %v1023
  %1065 = vmatpush.msra.mxu0 %v1022
  %1066 = vmatpush.msra.mxu0 %v1021
  %1067 = vmatpush.msra.mxu0 %v1020
  %1068 = vmatpush.msra.mxu0 %v1019
  %1069 = vmatpush.msra.mxu0 %v1018
  %1070 = vmatpush.msra.mxu0 %v1017
  %1071 = vmatpush.msra.mxu0 %v1016
  %1072 = vmatmul.f32.gmra.mxu0 %v1045
  %v1073 = vpop.f32.mrf.mxu0
  %v1074 = vadd.f32 %v1027, %v1073
  %1075 = vmatmul.f32.gmra.mxu0 %v1048
  %v1076 = vpop.f32.mrf.mxu0
  %v1077 = vadd.f32 %v1032, %v1076
  %1078 = vmatmul.f32.gmra.mxu0 %v1051
  %v1079 = vpop.f32.mrf.mxu0
  %v1080 = vadd.f32 %v1037, %v1079
  %1081 = vmatmul.f32.gmra.mxu0 %v1054
  %v1082 = vpop.f32.mrf.mxu0
  %v1083 = vadd.f32 %v1042, %v1082
  %1084 = vdwg.mxu0
  %1086 = vset.pattern.permute.xlu0 0
  %1087 = vperm.xlu0 %1086, %v680
  %v1088 = vpop.permute.xlu0 %1087
  %1091 = vset.pattern.permute.xlu0 0
  %1092 = vperm.xlu0 %1091, %v681
  %v1093 = vpop.permute.xlu0 %1092
  %1096 = vset.pattern.permute.xlu0 0
  %1097 = vperm.xlu0 %1096, %v682
  %v1098 = vpop.permute.xlu0 %1097
  %1101 = vset.pattern.permute.xlu0 0
  %1102 = vperm.xlu0 %1101, %v683
  %v1103 = vpop.permute.xlu0 %1102
  %v1105 = vmul.f32 %v1088, %v1074
  %v1106 = vmul.f32 %v1093, %v1077
  %v1107 = vmul.f32 %v1098, %v1080
  %v1108 = vmul.f32 %v1103, %v1083
  %v1109 = vsub.f32 0.0, %v1105
  %v1110 = vsub.f32 0.0, %v1106
  %v1111 = vsub.f32 0.0, %v1107
  %v1112 = vsub.f32 0.0, %v1108
  %v1113 = vmul.f32 %v1109, 1.442695
  %v1114 = vpow.pop %v1113
  %v1115 = vmul.f32 %v1110, 1.442695
  %v1116 = vpow.pop %v1115
  %v1117 = vmul.f32 %v1111, 1.442695
  %v1118 = vpow.pop %v1117
  %v1119 = vmul.f32 %v1112, 1.442695
  %v1120 = vpow.pop %v1119
  %v1121 = vadd.f32 %v1114, 1.0
  %v1122 = vadd.f32 %v1116, 1.0
  %v1123 = vadd.f32 %v1118, 1.0
  %v1124 = vadd.f32 %v1120, 1.0
  %v1125 = vrcp.pop %v1121
  %v1126 = vrcp.pop %v1122
  %v1127 = vrcp.pop %v1123
  %v1128 = vrcp.pop %v1124
  %v1129 = vmul.f32 %v1074, %v1125
  %v1130 = vmul.f32 %v1077, %v1126
  %v1131 = vmul.f32 %v1080, %v1127
  %v1132 = vmul.f32 %v1083, %v1128
  %v1133 = vadd.f32 %v1129, %v623
  %v1134 = vadd.f32 %v1130, %v624
  %v1135 = vadd.f32 %v1131, %v625
  %v1136 = vadd.f32 %v1132, %v626
  %v1137 = vld [vmem:[%s12] sm:$0xff]
  %v1138 = vld [vmem:[%s12 + $0x8] sm:$0xff]
  %v1139 = vld [vmem:[%s12 + $0x10] sm:$0xff]
  %v1140 = vld [vmem:[%s12 + $0x18] sm:$0xff]
  %1142 = vset.pattern.permute.xlu0 0
  %1143 = vperm.xlu0 %1142, %v1137
  %v1144 = vpop.permute.xlu0 %1143
  %1147 = vset.pattern.permute.xlu0 0
  %1148 = vperm.xlu0 %1147, %v1138
  %v1149 = vpop.permute.xlu0 %1148
  %1152 = vset.pattern.permute.xlu0 0
  %1153 = vperm.xlu0 %1152, %v1139
  %v1154 = vpop.permute.xlu0 %1153
  %1157 = vset.pattern.permute.xlu0 0
  %1158 = vperm.xlu0 %1157, %v1140
  %v1159 = vpop.permute.xlu0 %1158
  %v1161 = vmul.f32 %v1133, %v1144
  %v1162 = vmul.f32 %v1134, %v1149
  %v1163 = vmul.f32 %v1135, %v1154
  %v1164 = vmul.f32 %v1136, %v1159
  %v1165 = vadd.f32 %v1161, %v1162
  %v1166 = vadd.f32 %v1165, %v1163
  %v1167 = vadd.f32 %v1166, %v1164
  %v1168 = vrot.slane %v1167, 4
  %v1169 = vadd.f32 %v1167, %v1168
  %v1170 = vrot.slane %v1169, 2
  %v1171 = vadd.f32 %v1169, %v1170
  %v1172 = vrot.slane %v1171, 1
  %v1173 = vadd.f32 %v1171, %v1172
  %v1174 = vld [vmem:[#allocation2] sm:$0x1]
  %1176 = vset.pattern.permute.xlu0 0
  %1177 = vperm.xlu0 %1176, %v1174
  %v1178 = vpop.permute.xlu0 %1177
  %v1180 = vperm.slane %v1178, 0
  %v1181 = vadd.f32 %v1173, %v1180
  %1182 = vst [vmem:[%s14] sm:$0x1] %v1181
  // Predicated region
  $region58: #{_score_forward_jit.1} parent=0 // pred_check
    _
  $region59: #{_score_forward_jit.1} parent=0 // pred_check_branch
    %1184 = sbr.rel (0) target = $region61
  $region60: #{_score_forward_jit.1} parent=0 // pred_region
    _
  $region61: #{_score_forward_jit.1} parent=0 // pred_fallthru
    _
  // Predicated region
  $region62: #{_score_forward_jit.1} parent=0 // pred_check
    _
  $region63: #{_score_forward_jit.1} parent=0 // pred_check_branch
    %1186 = sbr.rel (0) target = $region65
  $region64: #{_score_forward_jit.1} parent=0 // pred_region
    _
  $region65: #{_score_forward_jit.1} parent=0 // pred_fallthru
    _

</llo_original>
